<compile_context>
chip_gen: v5e
topology: v5e:2x2
jax: 0.10.0
libtpu: 0.0.40
codegen_flags: <defaults>
</compile_context>

<pallas_src>
import functools

import jax
import jax.numpy as jnp
from jax.experimental import pallas as pl
from jax.experimental.pallas import tpu as pltpu


# 3x3 tap offsets, tap-major order (must match the weight reshape order).
_OFFSETS = tuple((dy, dx) for dy in (-1, 0, 1) for dx in (-1, 0, 1))


def _tap_masks(H, W, L):
    """9 x (1, L) f32 validity masks, built in-kernel from iota.

    They reproduce SAME zero-padding for every 3x3 tap AND zero the
    cross-image wrap introduced by folding several images into the lane axis.
    """
    hw = H * W
    lane = jax.lax.broadcasted_iota(jnp.int32, (1, L), 1)
    if (W & (W - 1)) == 0 and (hw & (hw - 1)) == 0:
        # power-of-two fast path: pure bitwise VPU ops (no integer div/mod)
        pos = lane & (hw - 1)
        col = pos & (W - 1)
        row = pos >> (W.bit_length() - 1)
    else:
        pos = lane % hw
        col = pos % W
        row = pos // W
    masks = []
    for dy, dx in _OFFSETS:
        valid = ((row + dy >= 0) & (row + dy < H) &
                 (col + dx >= 0) & (col + dx < W))
        masks.append(valid.astype(jnp.float32))
    return masks


def _head_kernel(x_ref, w1_ref, w2_ref, w3_ref, b12_ref, b3_ref, o_ref, scr_ref,
                 *, H, W, G, Cin_pad, feat, Cout, cdtype):
    """Fused conv1+ReLU -> conv2+ReLU -> conv3 for G images (lane-folded).

    x_ref  : (1, Cin_pad, G*H*W)  input images, spatial+batch in lanes
    w1_ref : (feat, 9*Cin_pad)    reshaped conv1 weights (cdtype)
    w2_ref : (feat, 9*feat)       reshaped conv2 weights (cdtype)
    w3_ref : (9*feat, 1) f32 (Cout==1 VPU path)  or (Cout, 9*feat) cdtype
    b12_ref: (feat, 2) f32        [b1 | b2]
    b3_ref : (Cout, 1) f32
    o_ref  : (1, Cout, G*H*W)
    scr_ref: (9*max(feat,Cin_pad), G*H*W) cdtype  im2col staging scratch
    """
    hw = H * W
    L = G * hw
    masks = _tap_masks(H, W, L)              # built once, reused by all layers

    def shifted_tap(h, t):
        dy, dx = _OFFSETS[t]
        shift = (-(dy * W + dx)) % L
        if shift == 0:
            return h                          # centre tap: no roll, no halo
        return pltpu.roll(h, shift, axis=1) * masks[t]   # XLU roll + VPU mask

    def conv_mxu(h, c, w_ref, bias, relu):
        # Stage im2col of h into scratch rows [0, 9*c) (tap-major,
        # channel-minor), then ONE (M, 9*c) x (9*c, L) MXU matmul that reads
        # its RHS from the scratch ref -- no concat value, no vreg spills.
        for t in range(9):
            scr_ref[pl.ds(t * c, c), :] = shifted_tap(h, t).astype(cdtype)
        y = jnp.dot(w_ref[...], scr_ref[pl.ds(0, 9 * c), :],
                    preferred_element_type=jnp.float32)
        y = y + bias                          # f32 bias add (lane broadcast)
        return jnp.maximum(y, 0.0) if relu else y

    x = x_ref[0].astype(jnp.float32)          # (Cin_pad, L)
    b1 = b12_ref[:, 0:1]                      # (feat, 1)
    b2 = b12_ref[:, 1:2]

    h1 = conv_mxu(x, Cin_pad, w1_ref, b1, relu=True)      # (feat, L) f32
    h2 = conv_mxu(h1, feat, w2_ref, b2, relu=True)        # (feat, L) f32

    if Cout == 1:
        # Single-channel output conv: skip the M=1 MXU matmul.  9 per-tap VPU
        # FMAs against (feat, 1) weight columns + one sublane reduction.
        # Stays entirely in f32 (VPU path; v5e has no bf16 VALU).
        acc = jnp.zeros((feat, L), jnp.float32)
        for t in range(9):
            acc = acc + shifted_tap(h2, t) * w3_ref[pl.ds(t * feat, feat), :]
        y = jnp.sum(acc, axis=0, keepdims=True) + b3_ref[...]     # (1, L)
    else:
        y = conv_mxu(h2, feat, w3_ref, b3_ref[...], relu=False)   # (Cout, L)

    o_ref[0] = y.astype(o_ref.dtype)


def logit_classification_head(x_nchw, params, *, use_bf16_mxu=True,
                              images_per_step=None):
    """x_nchw: (N, Cin, H, W) f32 (PyTorch layout) -> (N, Cout, H, W).

    use_bf16_mxu: bf16 MXU operands with f32 accumulation (~3x less MXU work
        on v5e/v6e/v7x).  Set False for bit-tight numerics.
    images_per_step: images folded into the lane axis per grid step.  Default
        keeps >= 2 grid steps (both v7x TensorCores busy) and folds the rest.
    """
    N, Cin, H, W = x_nchw.shape
    hw = H * W
    feat = params["w1"].shape[-1]
    Cout = params["w3"].shape[-1]
    cdtype = jnp.bfloat16 if use_bf16_mxu else jnp.float32

    if images_per_step is None:
        images_per_step = N // 2 if (N >= 2 and N % 2 == 0) else 1
    G = images_per_step
    assert N % G == 0, (N, G)
    S = N // G
    L = G * hw

    Cin_pad = max(8, ((Cin + 7) // 8) * 8)    # 8-aligned tap blocks in scratch

    # (N, Cin, H, W) -> (S, Cin_pad, G*hw): G images folded into the lane axis.
    x = x_nchw.reshape(S, G, Cin, hw).transpose(0, 2, 1, 3).reshape(S, Cin, L)
    if Cin_pad != Cin:
        x = jnp.pad(x, ((0, 0), (0, Cin_pad - Cin), (0, 0)))

    def wr(w, cin_pad=None):
        # HWIO (3, 3, ci, co) -> (co, 9*ci) with tap-major / channel-minor K.
        if cin_pad is not None and cin_pad != w.shape[2]:
            w = jnp.pad(w, ((0, 0), (0, 0), (0, cin_pad - w.shape[2]), (0, 0)))
        return jnp.transpose(w.reshape(-1, w.shape[-1]), (1, 0))

    w1 = wr(params["w1"], Cin_pad).astype(cdtype)              # (feat, 9*Cin_pad)
    w2 = wr(params["w2"]).astype(cdtype)                       # (feat, 9*feat)
    if Cout == 1:
        w3 = params["w3"].reshape(-1, 1).astype(jnp.float32)   # (9*feat, 1) VPU path
        w3_spec = pl.BlockSpec((9 * feat, 1), lambda s: (0, 0))
    else:
        w3 = wr(params["w3"]).astype(cdtype)                   # (Cout, 9*feat) MXU path
        w3_spec = pl.BlockSpec((Cout, 9 * feat), lambda s: (0, 0))

    b12 = jnp.stack([params["b1"], params["b2"]], axis=1).astype(jnp.float32)
    b3 = params["b3"].reshape(-1, 1).astype(jnp.float32)        # (Cout, 1)

    kernel = functools.partial(_head_kernel, H=H, W=W, G=G, Cin_pad=Cin_pad,
                               feat=feat, Cout=Cout, cdtype=cdtype)

    out = pl.pallas_call(
        kernel,
        out_shape=jax.ShapeDtypeStruct((S, Cout, L), x_nchw.dtype),
        grid=(S,),
        in_specs=[
            pl.BlockSpec((1, Cin_pad, L), lambda s: (s, 0, 0)),
            pl.BlockSpec((feat, 9 * Cin_pad), lambda s: (0, 0)),
            pl.BlockSpec((feat, 9 * feat), lambda s: (0, 0)),
            w3_spec,
            pl.BlockSpec((feat, 2), lambda s: (0, 0)),
            pl.BlockSpec((Cout, 1), lambda s: (0, 0)),
        ],
        out_specs=pl.BlockSpec((1, Cout, L), lambda s: (s, 0, 0)),
        scratch_shapes=[pltpu.VMEM((9 * max(feat, Cin_pad), L), cdtype)],
        compiler_params=pltpu.CompilerParams(
            dimension_semantics=("parallel",)),
    )(x, w1, w2, w3, b12, b3)

    return (out.reshape(S, Cout, G, hw).transpose(0, 2, 1, 3)
               .reshape(N, Cout, H, W))


def init_params(key, in_channels, feature_size, out_channels):
    """Deterministic synthetic parameters (HWIO weights, per-Cout biases)."""
    ks = jax.random.split(key, 6)

    def wgt(k, cin, cout):
        fan_in = 3 * 3 * cin
        return (jax.random.normal(k, (3, 3, cin, cout), jnp.float32)
                * (1.0 / jnp.sqrt(fan_in)))

    def bia(k, cout):
        return jax.random.normal(k, (cout,), jnp.float32) * 0.01

    return {
        "w1": wgt(ks[0], in_channels, feature_size), "b1": bia(ks[1], feature_size),
        "w2": wgt(ks[2], feature_size, feature_size), "b2": bia(ks[3], feature_size),
        "w3": wgt(ks[4], feature_size, out_channels), "b3": bia(ks[5], out_channels),
    }


def _ref_conv(x, w, b, relu):
    y = jax.lax.conv_general_dilated(
        x, w, window_strides=(1, 1), padding="SAME",
        dimension_numbers=("NCHW", "HWIO", "NCHW"))
    y = y + b[None, :, None, None]
    return jnp.maximum(y, 0.0) if relu else y


def _ref_head(x, p):
    y = _ref_conv(x, p["w1"], p["b1"], True)
    y = _ref_conv(y, p["w2"], p["b2"], True)
    return _ref_conv(y, p["w3"], p["b3"], False)


if __name__ == "__main__":
    # Small shapes consistent with the module's forward:
    #   batch=2, in_channels=4, H=W=16, feature_size=32,
    #   num_anchors_per_loc=1, num_classes=1 -> output channels = 1
    N, Cin, H, W = 2, 4, 16, 16
    feature_size = 32
    out_channels = 1

    key = jax.random.PRNGKey(0)
    kx, kp, kx2 = jax.random.split(key, 3)
    x = jax.random.normal(kx, (N, Cin, H, W), jnp.float32)
    params = init_params(kp, Cin, feature_size, out_channels)

    head_bf16 = jax.jit(functools.partial(logit_classification_head,
                                          use_bf16_mxu=True))
    head_f32 = jax.jit(functools.partial(logit_classification_head,
                                         use_bf16_mxu=False))

    ref = _ref_head(x, params)

    out_f32 = jax.block_until_ready(head_f32(x, params))
    assert out_f32.shape == (N, out_channels, H, W), out_f32.shape
    err_f32 = float(jnp.max(jnp.abs(out_f32 - ref)))
    assert err_f32 < 5e-4, ("f32 path", err_f32)

    out_bf16 = jax.block_until_ready(head_bf16(x, params))
    assert out_bf16.shape == (N, out_channels, H, W), out_bf16.shape
    err_bf16 = float(jnp.max(jnp.abs(out_bf16 - ref)))
    assert err_bf16 < 8e-2, ("bf16 MXU path", err_bf16)

    # Batch-fold path: N=4 -> 2 grid steps x 2 images folded into the lanes
    # (checks the image-seam masking of the pltpu.roll wrap).
    x4 = jax.random.normal(kx2, (4, Cin, H, W), jnp.float32)
    out4 = jax.block_until_ready(head_f32(x4, params))
    err4 = float(jnp.max(jnp.abs(out4 - _ref_head(x4, params))))
    assert err4 < 5e-4, ("batch-fold path", err4)

    print("KERNEL_OK")
</pallas_src>

<mosaic_0001>
module attributes {stable_mosaic.version = 11 : i64} {
  func.func @_head_kernel(%arg0: i32, %arg1: memref<1x8x256xf32, #tpu.memory_space<vmem>>, %arg2: memref<32x72xf32, #tpu.memory_space<vmem>>, %arg3: memref<32x288xf32, #tpu.memory_space<vmem>>, %arg4: memref<288x1xf32, #tpu.memory_space<vmem>>, %arg5: memref<32x2xf32, #tpu.memory_space<vmem>>, %arg6: memref<1x1xf32, #tpu.memory_space<vmem>>, %arg7: memref<1x1x256xf32, #tpu.memory_space<vmem>>, %arg8: memref<288x256xf32, #tpu.memory_space<vmem>>) attributes {dimension_semantics = [#tpu.dimension_semantics<parallel>], iteration_bounds = array<i64: 2>, scalar_prefetch = 0 : i64, scratch_operands = 1 : i64, tpu.core_type = #tpu.core_type<tc>, window_params = [{transform_indices = @transform_0, window_bounds = array<i64: 1, 8, 256>}, {pipeline_mode = #tpu.pipeline_mode<synchronous>, transform_indices = @transform_1, window_bounds = array<i64: 32, 72>}, {pipeline_mode = #tpu.pipeline_mode<synchronous>, transform_indices = @transform_2, window_bounds = array<i64: 32, 288>}, {pipeline_mode = #tpu.pipeline_mode<synchronous>, transform_indices = @transform_3, window_bounds = array<i64: 288, 1>}, {pipeline_mode = #tpu.pipeline_mode<synchronous>, transform_indices = @transform_4, window_bounds = array<i64: 32, 2>}, {pipeline_mode = #tpu.pipeline_mode<synchronous>, transform_indices = @transform_5, window_bounds = array<i64: 1, 1>}, {transform_indices = @transform_6, window_bounds = array<i64: 1, 1, 256>}]} {
    %0 = tpu.iota {dimensions = array<i32: 1>} : vector<1x256xi32>
    %c255_i32 = arith.constant 255 : i32
    %1 = vector.broadcast %c255_i32 : i32 to vector<1x256xi32>
    %2 = arith.andi %0, %1 : vector<1x256xi32>
    %c15_i32 = arith.constant 15 : i32
    %3 = vector.broadcast %c15_i32 : i32 to vector<1x256xi32>
    %4 = arith.andi %2, %3 : vector<1x256xi32>
    %c4_i32 = arith.constant 4 : i32
    %5 = vector.broadcast %c4_i32 : i32 to vector<1x256xi32>
    %6 = arith.shrsi %2, %5 : vector<1x256xi32>
    %c-1_i32 = arith.constant -1 : i32
    %7 = vector.broadcast %c-1_i32 : i32 to vector<1x256xi32>
    %8 = arith.addi %6, %7 : vector<1x256xi32>
    %c0_i32 = arith.constant 0 : i32
    %9 = vector.broadcast %c0_i32 : i32 to vector<1x256xi32>
    %10 = arith.cmpi sge, %8, %9 : vector<1x256xi32>
    %c-1_i32_0 = arith.constant -1 : i32
    %11 = vector.broadcast %c-1_i32_0 : i32 to vector<1x256xi32>
    %12 = arith.addi %6, %11 : vector<1x256xi32>
    %c16_i32 = arith.constant 16 : i32
    %13 = vector.broadcast %c16_i32 : i32 to vector<1x256xi32>
    %14 = arith.cmpi slt, %12, %13 : vector<1x256xi32>
    %15 = arith.andi %10, %14 : vector<1x256xi1>
    %c-1_i32_1 = arith.constant -1 : i32
    %16 = vector.broadcast %c-1_i32_1 : i32 to vector<1x256xi32>
    %17 = arith.addi %4, %16 : vector<1x256xi32>
    %c0_i32_2 = arith.constant 0 : i32
    %18 = vector.broadcast %c0_i32_2 : i32 to vector<1x256xi32>
    %19 = arith.cmpi sge, %17, %18 : vector<1x256xi32>
    %20 = arith.andi %15, %19 : vector<1x256xi1>
    %c-1_i32_3 = arith.constant -1 : i32
    %21 = vector.broadcast %c-1_i32_3 : i32 to vector<1x256xi32>
    %22 = arith.addi %4, %21 : vector<1x256xi32>
    %c16_i32_4 = arith.constant 16 : i32
    %23 = vector.broadcast %c16_i32_4 : i32 to vector<1x256xi32>
    %24 = arith.cmpi slt, %22, %23 : vector<1x256xi32>
    %25 = arith.andi %20, %24 : vector<1x256xi1>
    %26 = arith.extui %25 : vector<1x256xi1> to vector<1x256xi32>
    %27 = arith.sitofp %26 : vector<1x256xi32> to vector<1x256xf32>
    %c-1_i32_5 = arith.constant -1 : i32
    %28 = vector.broadcast %c-1_i32_5 : i32 to vector<1x256xi32>
    %29 = arith.addi %6, %28 : vector<1x256xi32>
    %c0_i32_6 = arith.constant 0 : i32
    %30 = vector.broadcast %c0_i32_6 : i32 to vector<1x256xi32>
    %31 = arith.cmpi sge, %29, %30 : vector<1x256xi32>
    %c-1_i32_7 = arith.constant -1 : i32
    %32 = vector.broadcast %c-1_i32_7 : i32 to vector<1x256xi32>
    %33 = arith.addi %6, %32 : vector<1x256xi32>
    %c16_i32_8 = arith.constant 16 : i32
    %34 = vector.broadcast %c16_i32_8 : i32 to vector<1x256xi32>
    %35 = arith.cmpi slt, %33, %34 : vector<1x256xi32>
    %36 = arith.andi %31, %35 : vector<1x256xi1>
    %c0_i32_9 = arith.constant 0 : i32
    %37 = vector.broadcast %c0_i32_9 : i32 to vector<1x256xi32>
    %38 = arith.addi %4, %37 : vector<1x256xi32>
    %c0_i32_10 = arith.constant 0 : i32
    %39 = vector.broadcast %c0_i32_10 : i32 to vector<1x256xi32>
    %40 = arith.cmpi sge, %38, %39 : vector<1x256xi32>
    %41 = arith.andi %36, %40 : vector<1x256xi1>
    %c0_i32_11 = arith.constant 0 : i32
    %42 = vector.broadcast %c0_i32_11 : i32 to vector<1x256xi32>
    %43 = arith.addi %4, %42 : vector<1x256xi32>
    %c16_i32_12 = arith.constant 16 : i32
    %44 = vector.broadcast %c16_i32_12 : i32 to vector<1x256xi32>
    %45 = arith.cmpi slt, %43, %44 : vector<1x256xi32>
    %46 = arith.andi %41, %45 : vector<1x256xi1>
    %47 = arith.extui %46 : vector<1x256xi1> to vector<1x256xi32>
    %48 = arith.sitofp %47 : vector<1x256xi32> to vector<1x256xf32>
    %c-1_i32_13 = arith.constant -1 : i32
    %49 = vector.broadcast %c-1_i32_13 : i32 to vector<1x256xi32>
    %50 = arith.addi %6, %49 : vector<1x256xi32>
    %c0_i32_14 = arith.constant 0 : i32
    %51 = vector.broadcast %c0_i32_14 : i32 to vector<1x256xi32>
    %52 = arith.cmpi sge, %50, %51 : vector<1x256xi32>
    %c-1_i32_15 = arith.constant -1 : i32
    %53 = vector.broadcast %c-1_i32_15 : i32 to vector<1x256xi32>
    %54 = arith.addi %6, %53 : vector<1x256xi32>
    %c16_i32_16 = arith.constant 16 : i32
    %55 = vector.broadcast %c16_i32_16 : i32 to vector<1x256xi32>
    %56 = arith.cmpi slt, %54, %55 : vector<1x256xi32>
    %57 = arith.andi %52, %56 : vector<1x256xi1>
    %c1_i32 = arith.constant 1 : i32
    %58 = vector.broadcast %c1_i32 : i32 to vector<1x256xi32>
    %59 = arith.addi %4, %58 : vector<1x256xi32>
    %c0_i32_17 = arith.constant 0 : i32
    %60 = vector.broadcast %c0_i32_17 : i32 to vector<1x256xi32>
    %61 = arith.cmpi sge, %59, %60 : vector<1x256xi32>
    %62 = arith.andi %57, %61 : vector<1x256xi1>
    %c1_i32_18 = arith.constant 1 : i32
    %63 = vector.broadcast %c1_i32_18 : i32 to vector<1x256xi32>
    %64 = arith.addi %4, %63 : vector<1x256xi32>
    %c16_i32_19 = arith.constant 16 : i32
    %65 = vector.broadcast %c16_i32_19 : i32 to vector<1x256xi32>
    %66 = arith.cmpi slt, %64, %65 : vector<1x256xi32>
    %67 = arith.andi %62, %66 : vector<1x256xi1>
    %68 = arith.extui %67 : vector<1x256xi1> to vector<1x256xi32>
    %69 = arith.sitofp %68 : vector<1x256xi32> to vector<1x256xf32>
    %c0_i32_20 = arith.constant 0 : i32
    %70 = vector.broadcast %c0_i32_20 : i32 to vector<1x256xi32>
    %71 = arith.addi %6, %70 : vector<1x256xi32>
    %c0_i32_21 = arith.constant 0 : i32
    %72 = vector.broadcast %c0_i32_21 : i32 to vector<1x256xi32>
    %73 = arith.cmpi sge, %71, %72 : vector<1x256xi32>
    %c0_i32_22 = arith.constant 0 : i32
    %74 = vector.broadcast %c0_i32_22 : i32 to vector<1x256xi32>
    %75 = arith.addi %6, %74 : vector<1x256xi32>
    %c16_i32_23 = arith.constant 16 : i32
    %76 = vector.broadcast %c16_i32_23 : i32 to vector<1x256xi32>
    %77 = arith.cmpi slt, %75, %76 : vector<1x256xi32>
    %78 = arith.andi %73, %77 : vector<1x256xi1>
    %c-1_i32_24 = arith.constant -1 : i32
    %79 = vector.broadcast %c-1_i32_24 : i32 to vector<1x256xi32>
    %80 = arith.addi %4, %79 : vector<1x256xi32>
    %c0_i32_25 = arith.constant 0 : i32
    %81 = vector.broadcast %c0_i32_25 : i32 to vector<1x256xi32>
    %82 = arith.cmpi sge, %80, %81 : vector<1x256xi32>
    %83 = arith.andi %78, %82 : vector<1x256xi1>
    %c-1_i32_26 = arith.constant -1 : i32
    %84 = vector.broadcast %c-1_i32_26 : i32 to vector<1x256xi32>
    %85 = arith.addi %4, %84 : vector<1x256xi32>
    %c16_i32_27 = arith.constant 16 : i32
    %86 = vector.broadcast %c16_i32_27 : i32 to vector<1x256xi32>
    %87 = arith.cmpi slt, %85, %86 : vector<1x256xi32>
    %88 = arith.andi %83, %87 : vector<1x256xi1>
    %89 = arith.extui %88 : vector<1x256xi1> to vector<1x256xi32>
    %90 = arith.sitofp %89 : vector<1x256xi32> to vector<1x256xf32>
    %c0_i32_28 = arith.constant 0 : i32
    %91 = vector.broadcast %c0_i32_28 : i32 to vector<1x256xi32>
    %92 = arith.addi %6, %91 : vector<1x256xi32>
    %c0_i32_29 = arith.constant 0 : i32
    %93 = vector.broadcast %c0_i32_29 : i32 to vector<1x256xi32>
    %94 = arith.cmpi sge, %92, %93 : vector<1x256xi32>
    %c0_i32_30 = arith.constant 0 : i32
    %95 = vector.broadcast %c0_i32_30 : i32 to vector<1x256xi32>
    %96 = arith.addi %6, %95 : vector<1x256xi32>
    %c16_i32_31 = arith.constant 16 : i32
    %97 = vector.broadcast %c16_i32_31 : i32 to vector<1x256xi32>
    %98 = arith.cmpi slt, %96, %97 : vector<1x256xi32>
    %99 = arith.andi %94, %98 : vector<1x256xi1>
    %c1_i32_32 = arith.constant 1 : i32
    %100 = vector.broadcast %c1_i32_32 : i32 to vector<1x256xi32>
    %101 = arith.addi %4, %100 : vector<1x256xi32>
    %c0_i32_33 = arith.constant 0 : i32
    %102 = vector.broadcast %c0_i32_33 : i32 to vector<1x256xi32>
    %103 = arith.cmpi sge, %101, %102 : vector<1x256xi32>
    %104 = arith.andi %99, %103 : vector<1x256xi1>
    %c1_i32_34 = arith.constant 1 : i32
    %105 = vector.broadcast %c1_i32_34 : i32 to vector<1x256xi32>
    %106 = arith.addi %4, %105 : vector<1x256xi32>
    %c16_i32_35 = arith.constant 16 : i32
    %107 = vector.broadcast %c16_i32_35 : i32 to vector<1x256xi32>
    %108 = arith.cmpi slt, %106, %107 : vector<1x256xi32>
    %109 = arith.andi %104, %108 : vector<1x256xi1>
    %110 = arith.extui %109 : vector<1x256xi1> to vector<1x256xi32>
    %111 = arith.sitofp %110 : vector<1x256xi32> to vector<1x256xf32>
    %c1_i32_36 = arith.constant 1 : i32
    %112 = vector.broadcast %c1_i32_36 : i32 to vector<1x256xi32>
    %113 = arith.addi %6, %112 : vector<1x256xi32>
    %c0_i32_37 = arith.constant 0 : i32
    %114 = vector.broadcast %c0_i32_37 : i32 to vector<1x256xi32>
    %115 = arith.cmpi sge, %113, %114 : vector<1x256xi32>
    %c1_i32_38 = arith.constant 1 : i32
    %116 = vector.broadcast %c1_i32_38 : i32 to vector<1x256xi32>
    %117 = arith.addi %6, %116 : vector<1x256xi32>
    %c16_i32_39 = arith.constant 16 : i32
    %118 = vector.broadcast %c16_i32_39 : i32 to vector<1x256xi32>
    %119 = arith.cmpi slt, %117, %118 : vector<1x256xi32>
    %120 = arith.andi %115, %119 : vector<1x256xi1>
    %c-1_i32_40 = arith.constant -1 : i32
    %121 = vector.broadcast %c-1_i32_40 : i32 to vector<1x256xi32>
    %122 = arith.addi %4, %121 : vector<1x256xi32>
    %c0_i32_41 = arith.constant 0 : i32
    %123 = vector.broadcast %c0_i32_41 : i32 to vector<1x256xi32>
    %124 = arith.cmpi sge, %122, %123 : vector<1x256xi32>
    %125 = arith.andi %120, %124 : vector<1x256xi1>
    %c-1_i32_42 = arith.constant -1 : i32
    %126 = vector.broadcast %c-1_i32_42 : i32 to vector<1x256xi32>
    %127 = arith.addi %4, %126 : vector<1x256xi32>
    %c16_i32_43 = arith.constant 16 : i32
    %128 = vector.broadcast %c16_i32_43 : i32 to vector<1x256xi32>
    %129 = arith.cmpi slt, %127, %128 : vector<1x256xi32>
    %130 = arith.andi %125, %129 : vector<1x256xi1>
    %131 = arith.extui %130 : vector<1x256xi1> to vector<1x256xi32>
    %132 = arith.sitofp %131 : vector<1x256xi32> to vector<1x256xf32>
    %c1_i32_44 = arith.constant 1 : i32
    %133 = vector.broadcast %c1_i32_44 : i32 to vector<1x256xi32>
    %134 = arith.addi %6, %133 : vector<1x256xi32>
    %c0_i32_45 = arith.constant 0 : i32
    %135 = vector.broadcast %c0_i32_45 : i32 to vector<1x256xi32>
    %136 = arith.cmpi sge, %134, %135 : vector<1x256xi32>
    %c1_i32_46 = arith.constant 1 : i32
    %137 = vector.broadcast %c1_i32_46 : i32 to vector<1x256xi32>
    %138 = arith.addi %6, %137 : vector<1x256xi32>
    %c16_i32_47 = arith.constant 16 : i32
    %139 = vector.broadcast %c16_i32_47 : i32 to vector<1x256xi32>
    %140 = arith.cmpi slt, %138, %139 : vector<1x256xi32>
    %141 = arith.andi %136, %140 : vector<1x256xi1>
    %c0_i32_48 = arith.constant 0 : i32
    %142 = vector.broadcast %c0_i32_48 : i32 to vector<1x256xi32>
    %143 = arith.addi %4, %142 : vector<1x256xi32>
    %c0_i32_49 = arith.constant 0 : i32
    %144 = vector.broadcast %c0_i32_49 : i32 to vector<1x256xi32>
    %145 = arith.cmpi sge, %143, %144 : vector<1x256xi32>
    %146 = arith.andi %141, %145 : vector<1x256xi1>
    %c0_i32_50 = arith.constant 0 : i32
    %147 = vector.broadcast %c0_i32_50 : i32 to vector<1x256xi32>
    %148 = arith.addi %4, %147 : vector<1x256xi32>
    %c16_i32_51 = arith.constant 16 : i32
    %149 = vector.broadcast %c16_i32_51 : i32 to vector<1x256xi32>
    %150 = arith.cmpi slt, %148, %149 : vector<1x256xi32>
    %151 = arith.andi %146, %150 : vector<1x256xi1>
    %152 = arith.extui %151 : vector<1x256xi1> to vector<1x256xi32>
    %153 = arith.sitofp %152 : vector<1x256xi32> to vector<1x256xf32>
    %c1_i32_52 = arith.constant 1 : i32
    %154 = vector.broadcast %c1_i32_52 : i32 to vector<1x256xi32>
    %155 = arith.addi %6, %154 : vector<1x256xi32>
    %c0_i32_53 = arith.constant 0 : i32
    %156 = vector.broadcast %c0_i32_53 : i32 to vector<1x256xi32>
    %157 = arith.cmpi sge, %155, %156 : vector<1x256xi32>
    %c1_i32_54 = arith.constant 1 : i32
    %158 = vector.broadcast %c1_i32_54 : i32 to vector<1x256xi32>
    %159 = arith.addi %6, %158 : vector<1x256xi32>
    %c16_i32_55 = arith.constant 16 : i32
    %160 = vector.broadcast %c16_i32_55 : i32 to vector<1x256xi32>
    %161 = arith.cmpi slt, %159, %160 : vector<1x256xi32>
    %162 = arith.andi %157, %161 : vector<1x256xi1>
    %c1_i32_56 = arith.constant 1 : i32
    %163 = vector.broadcast %c1_i32_56 : i32 to vector<1x256xi32>
    %164 = arith.addi %4, %163 : vector<1x256xi32>
    %c0_i32_57 = arith.constant 0 : i32
    %165 = vector.broadcast %c0_i32_57 : i32 to vector<1x256xi32>
    %166 = arith.cmpi sge, %164, %165 : vector<1x256xi32>
    %167 = arith.andi %162, %166 : vector<1x256xi1>
    %c1_i32_58 = arith.constant 1 : i32
    %168 = vector.broadcast %c1_i32_58 : i32 to vector<1x256xi32>
    %169 = arith.addi %4, %168 : vector<1x256xi32>
    %c16_i32_59 = arith.constant 16 : i32
    %170 = vector.broadcast %c16_i32_59 : i32 to vector<1x256xi32>
    %171 = arith.cmpi slt, %169, %170 : vector<1x256xi32>
    %172 = arith.andi %167, %171 : vector<1x256xi1>
    %173 = arith.extui %172 : vector<1x256xi1> to vector<1x256xi32>
    %174 = arith.sitofp %173 : vector<1x256xi32> to vector<1x256xf32>
    %c0 = arith.constant 0 : index
    %c0_60 = arith.constant 0 : index
    %c0_61 = arith.constant 0 : index
    %175 = vector.load %arg1[%c0, %c0_60, %c0_61] : memref<1x8x256xf32, #tpu.memory_space<vmem>>, vector<1x8x256xf32>
    %176 = vector.shape_cast %175 : vector<1x8x256xf32> to vector<8x256xf32>
    %c0_62 = arith.constant 0 : index
    %c0_63 = arith.constant 0 : index
    %177 = vector.load %arg5[%c0_62, %c0_63] : memref<32x2xf32, #tpu.memory_space<vmem>>, vector<32x1xf32>
    %c0_64 = arith.constant 0 : index
    %c1 = arith.constant 1 : index
    %178 = vector.load %arg5[%c0_64, %c1] : memref<32x2xf32, #tpu.memory_space<vmem>>, vector<32x1xf32>
    %c17_i32 = arith.constant 17 : i32
    %179 = tpu.dynamic_rotate %176 by %c17_i32 dim 1 : vector<8x256xf32>, i32 -> vector<8x256xf32>
    %180 = vector.broadcast %27 : vector<1x256xf32> to vector<8x256xf32>
    %181 = arith.mulf %179, %180 : vector<8x256xf32>
    %c0_65 = arith.constant 0 : index
    %c0_66 = arith.constant 0 : index
    %182 = vector.load %arg8[%c0_65, %c0_66] : memref<288x256xf32, #tpu.memory_space<vmem>>, vector<8x256xf32>
    tpu.vector_store %arg8[%c0_65, %c0_66], %181 {strides = array<i32>} : memref<288x256xf32, #tpu.memory_space<vmem>>, vector<8x256xf32>,
    %c16_i32_67 = arith.constant 16 : i32
    %183 = tpu.dynamic_rotate %176 by %c16_i32_67 dim 1 : vector<8x256xf32>, i32 -> vector<8x256xf32>
    %184 = vector.broadcast %48 : vector<1x256xf32> to vector<8x256xf32>
    %185 = arith.mulf %183, %184 : vector<8x256xf32>
    %c8 = arith.constant 8 : index
    %c0_68 = arith.constant 0 : index
    %186 = vector.load %arg8[%c8, %c0_68] : memref<288x256xf32, #tpu.memory_space<vmem>>, vector<8x256xf32>
    tpu.vector_store %arg8[%c8, %c0_68], %185 {strides = array<i32>} : memref<288x256xf32, #tpu.memory_space<vmem>>, vector<8x256xf32>,
    %c15_i32_69 = arith.constant 15 : i32
    %187 = tpu.dynamic_rotate %176 by %c15_i32_69 dim 1 : vector<8x256xf32>, i32 -> vector<8x256xf32>
    %188 = vector.broadcast %69 : vector<1x256xf32> to vector<8x256xf32>
    %189 = arith.mulf %187, %188 : vector<8x256xf32>
    %c16 = arith.constant 16 : index
    %c0_70 = arith.constant 0 : index
    %190 = vector.load %arg8[%c16, %c0_70] : memref<288x256xf32, #tpu.memory_space<vmem>>, vector<8x256xf32>
    tpu.vector_store %arg8[%c16, %c0_70], %189 {strides = array<i32>} : memref<288x256xf32, #tpu.memory_space<vmem>>, vector<8x256xf32>,
    %c1_i32_71 = arith.constant 1 : i32
    %191 = tpu.dynamic_rotate %176 by %c1_i32_71 dim 1 : vector<8x256xf32>, i32 -> vector<8x256xf32>
    %192 = vector.broadcast %90 : vector<1x256xf32> to vector<8x256xf32>
    %193 = arith.mulf %191, %192 : vector<8x256xf32>
    %c24 = arith.constant 24 : index
    %c0_72 = arith.constant 0 : index
    %194 = vector.load %arg8[%c24, %c0_72] : memref<288x256xf32, #tpu.memory_space<vmem>>, vector<8x256xf32>
    tpu.vector_store %arg8[%c24, %c0_72], %193 {strides = array<i32>} : memref<288x256xf32, #tpu.memory_space<vmem>>, vector<8x256xf32>,
    %c32 = arith.constant 32 : index
    %c0_73 = arith.constant 0 : index
    %195 = vector.load %arg8[%c32, %c0_73] : memref<288x256xf32, #tpu.memory_space<vmem>>, vector<8x256xf32>
    tpu.vector_store %arg8[%c32, %c0_73], %176 {strides = array<i32>} : memref<288x256xf32, #tpu.memory_space<vmem>>, vector<8x256xf32>,
    %c255_i32_74 = arith.constant 255 : i32
    %196 = tpu.dynamic_rotate %176 by %c255_i32_74 dim 1 : vector<8x256xf32>, i32 -> vector<8x256xf32>
    %197 = vector.broadcast %111 : vector<1x256xf32> to vector<8x256xf32>
    %198 = arith.mulf %196, %197 : vector<8x256xf32>
    %c40 = arith.constant 40 : index
    %c0_75 = arith.constant 0 : index
    %199 = vector.load %arg8[%c40, %c0_75] : memref<288x256xf32, #tpu.memory_space<vmem>>, vector<8x256xf32>
    tpu.vector_store %arg8[%c40, %c0_75], %198 {strides = array<i32>} : memref<288x256xf32, #tpu.memory_space<vmem>>, vector<8x256xf32>,
    %c241_i32 = arith.constant 241 : i32
    %200 = tpu.dynamic_rotate %176 by %c241_i32 dim 1 : vector<8x256xf32>, i32 -> vector<8x256xf32>
    %201 = vector.broadcast %132 : vector<1x256xf32> to vector<8x256xf32>
    %202 = arith.mulf %200, %201 : vector<8x256xf32>
    %c48 = arith.constant 48 : index
    %c0_76 = arith.constant 0 : index
    %203 = vector.load %arg8[%c48, %c0_76] : memref<288x256xf32, #tpu.memory_space<vmem>>, vector<8x256xf32>
    tpu.vector_store %arg8[%c48, %c0_76], %202 {strides = array<i32>} : memref<288x256xf32, #tpu.memory_space<vmem>>, vector<8x256xf32>,
    %c240_i32 = arith.constant 240 : i32
    %204 = tpu.dynamic_rotate %176 by %c240_i32 dim 1 : vector<8x256xf32>, i32 -> vector<8x256xf32>
    %205 = vector.broadcast %153 : vector<1x256xf32> to vector<8x256xf32>
    %206 = arith.mulf %204, %205 : vector<8x256xf32>
    %c56 = arith.constant 56 : index
    %c0_77 = arith.constant 0 : index
    %207 = vector.load %arg8[%c56, %c0_77] : memref<288x256xf32, #tpu.memory_space<vmem>>, vector<8x256xf32>
    tpu.vector_store %arg8[%c56, %c0_77], %206 {strides = array<i32>} : memref<288x256xf32, #tpu.memory_space<vmem>>, vector<8x256xf32>,
    %c239_i32 = arith.constant 239 : i32
    %208 = tpu.dynamic_rotate %176 by %c239_i32 dim 1 : vector<8x256xf32>, i32 -> vector<8x256xf32>
    %209 = vector.broadcast %174 : vector<1x256xf32> to vector<8x256xf32>
    %210 = arith.mulf %208, %209 : vector<8x256xf32>
    %c64 = arith.constant 64 : index
    %c0_78 = arith.constant 0 : index
    %211 = vector.load %arg8[%c64, %c0_78] : memref<288x256xf32, #tpu.memory_space<vmem>>, vector<8x256xf32>
    tpu.vector_store %arg8[%c64, %c0_78], %210 {strides = array<i32>} : memref<288x256xf32, #tpu.memory_space<vmem>>, vector<8x256xf32>,
    %c0_79 = arith.constant 0 : index
    %c0_80 = arith.constant 0 : index
    %212 = vector.load %arg2[%c0_79, %c0_80] : memref<32x72xf32, #tpu.memory_space<vmem>>, vector<32x72xf32>
    %c0_81 = arith.constant 0 : index
    %c0_82 = arith.constant 0 : index
    %213 = vector.load %arg8[%c0_81, %c0_82] : memref<288x256xf32, #tpu.memory_space<vmem>>, vector<72x256xf32>
    %cst = arith.constant dense<0.000000e+00> : vector<32x256xf32>
    %214 = tpu.matmul %212, %213, %cst {dimension_numbers = #tpu.dot_dimension_numbers<[1], [0], [0], [1], [0, 0, 1, 1], [], []>} : vector<32x72xf32>, vector<72x256xf32>, vector<32x256xf32> -> vector<32x256xf32>
    %215 = vector.broadcast %177 : vector<32x1xf32> to vector<32x256xf32>
    %216 = arith.addf %214, %215 : vector<32x256xf32>
    %cst_83 = arith.constant 0.000000e+00 : f32
    %217 = vector.broadcast %cst_83 : f32 to vector<32x256xf32>
    %218 = arith.maximumf %216, %217 : vector<32x256xf32>
    %c17_i32_84 = arith.constant 17 : i32
    %219 = tpu.dynamic_rotate %218 by %c17_i32_84 dim 1 : vector<32x256xf32>, i32 -> vector<32x256xf32>
    %220 = vector.broadcast %27 : vector<1x256xf32> to vector<32x256xf32>
    %221 = arith.mulf %219, %220 : vector<32x256xf32>
    %c0_85 = arith.constant 0 : index
    %c0_86 = arith.constant 0 : index
    %222 = vector.load %arg8[%c0_85, %c0_86] : memref<288x256xf32, #tpu.memory_space<vmem>>, vector<32x256xf32>
    tpu.vector_store %arg8[%c0_85, %c0_86], %221 {strides = array<i32>} : memref<288x256xf32, #tpu.memory_space<vmem>>, vector<32x256xf32>,
    %c16_i32_87 = arith.constant 16 : i32
    %223 = tpu.dynamic_rotate %218 by %c16_i32_87 dim 1 : vector<32x256xf32>, i32 -> vector<32x256xf32>
    %224 = vector.broadcast %48 : vector<1x256xf32> to vector<32x256xf32>
    %225 = arith.mulf %223, %224 : vector<32x256xf32>
    %c32_88 = arith.constant 32 : index
    %c0_89 = arith.constant 0 : index
    %226 = vector.load %arg8[%c32_88, %c0_89] : memref<288x256xf32, #tpu.memory_space<vmem>>, vector<32x256xf32>
    tpu.vector_store %arg8[%c32_88, %c0_89], %225 {strides = array<i32>} : memref<288x256xf32, #tpu.memory_space<vmem>>, vector<32x256xf32>,
    %c15_i32_90 = arith.constant 15 : i32
    %227 = tpu.dynamic_rotate %218 by %c15_i32_90 dim 1 : vector<32x256xf32>, i32 -> vector<32x256xf32>
    %228 = vector.broadcast %69 : vector<1x256xf32> to vector<32x256xf32>
    %229 = arith.mulf %227, %228 : vector<32x256xf32>
    %c64_91 = arith.constant 64 : index
    %c0_92 = arith.constant 0 : index
    %230 = vector.load %arg8[%c64_91, %c0_92] : memref<288x256xf32, #tpu.memory_space<vmem>>, vector<32x256xf32>
    tpu.vector_store %arg8[%c64_91, %c0_92], %229 {strides = array<i32>} : memref<288x256xf32, #tpu.memory_space<vmem>>, vector<32x256xf32>,
    %c1_i32_93 = arith.constant 1 : i32
    %231 = tpu.dynamic_rotate %218 by %c1_i32_93 dim 1 : vector<32x256xf32>, i32 -> vector<32x256xf32>
    %232 = vector.broadcast %90 : vector<1x256xf32> to vector<32x256xf32>
    %233 = arith.mulf %231, %232 : vector<32x256xf32>
    %c96 = arith.constant 96 : index
    %c0_94 = arith.constant 0 : index
    %234 = vector.load %arg8[%c96, %c0_94] : memref<288x256xf32, #tpu.memory_space<vmem>>, vector<32x256xf32>
    tpu.vector_store %arg8[%c96, %c0_94], %233 {strides = array<i32>} : memref<288x256xf32, #tpu.memory_space<vmem>>, vector<32x256xf32>,
    %c128 = arith.constant 128 : index
    %c0_95 = arith.constant 0 : index
    %235 = vector.load %arg8[%c128, %c0_95] : memref<288x256xf32, #tpu.memory_space<vmem>>, vector<32x256xf32>
    tpu.vector_store %arg8[%c128, %c0_95], %218 {strides = array<i32>} : memref<288x256xf32, #tpu.memory_space<vmem>>, vector<32x256xf32>,
    %c255_i32_96 = arith.constant 255 : i32
    %236 = tpu.dynamic_rotate %218 by %c255_i32_96 dim 1 : vector<32x256xf32>, i32 -> vector<32x256xf32>
    %237 = vector.broadcast %111 : vector<1x256xf32> to vector<32x256xf32>
    %238 = arith.mulf %236, %237 : vector<32x256xf32>
    %c160 = arith.constant 160 : index
    %c0_97 = arith.constant 0 : index
    %239 = vector.load %arg8[%c160, %c0_97] : memref<288x256xf32, #tpu.memory_space<vmem>>, vector<32x256xf32>
    tpu.vector_store %arg8[%c160, %c0_97], %238 {strides = array<i32>} : memref<288x256xf32, #tpu.memory_space<vmem>>, vector<32x256xf32>,
    %c241_i32_98 = arith.constant 241 : i32
    %240 = tpu.dynamic_rotate %218 by %c241_i32_98 dim 1 : vector<32x256xf32>, i32 -> vector<32x256xf32>
    %241 = vector.broadcast %132 : vector<1x256xf32> to vector<32x256xf32>
    %242 = arith.mulf %240, %241 : vector<32x256xf32>
    %c192 = arith.constant 192 : index
    %c0_99 = arith.constant 0 : index
    %243 = vector.load %arg8[%c192, %c0_99] : memref<288x256xf32, #tpu.memory_space<vmem>>, vector<32x256xf32>
    tpu.vector_store %arg8[%c192, %c0_99], %242 {strides = array<i32>} : memref<288x256xf32, #tpu.memory_space<vmem>>, vector<32x256xf32>,
    %c240_i32_100 = arith.constant 240 : i32
    %244 = tpu.dynamic_rotate %218 by %c240_i32_100 dim 1 : vector<32x256xf32>, i32 -> vector<32x256xf32>
    %245 = vector.broadcast %153 : vector<1x256xf32> to vector<32x256xf32>
    %246 = arith.mulf %244, %245 : vector<32x256xf32>
    %c224 = arith.constant 224 : index
    %c0_101 = arith.constant 0 : index
    %247 = vector.load %arg8[%c224, %c0_101] : memref<288x256xf32, #tpu.memory_space<vmem>>, vector<32x256xf32>
    tpu.vector_store %arg8[%c224, %c0_101], %246 {strides = array<i32>} : memref<288x256xf32, #tpu.memory_space<vmem>>, vector<32x256xf32>,
    %c239_i32_102 = arith.constant 239 : i32
    %248 = tpu.dynamic_rotate %218 by %c239_i32_102 dim 1 : vector<32x256xf32>, i32 -> vector<32x256xf32>
    %249 = vector.broadcast %174 : vector<1x256xf32> to vector<32x256xf32>
    %250 = arith.mulf %248, %249 : vector<32x256xf32>
    %c256 = arith.constant 256 : index
    %c0_103 = arith.constant 0 : index
    %251 = vector.load %arg8[%c256, %c0_103] : memref<288x256xf32, #tpu.memory_space<vmem>>, vector<32x256xf32>
    tpu.vector_store %arg8[%c256, %c0_103], %250 {strides = array<i32>} : memref<288x256xf32, #tpu.memory_space<vmem>>, vector<32x256xf32>,
    %c0_104 = arith.constant 0 : index
    %c0_105 = arith.constant 0 : index
    %252 = vector.load %arg3[%c0_104, %c0_105] : memref<32x288xf32, #tpu.memory_space<vmem>>, vector<32x288xf32>
    %c0_106 = arith.constant 0 : index
    %c0_107 = arith.constant 0 : index
    %253 = vector.load %arg8[%c0_106, %c0_107] : memref<288x256xf32, #tpu.memory_space<vmem>>, vector<288x256xf32>
    %cst_108 = arith.constant dense<0.000000e+00> : vector<32x256xf32>
    %254 = tpu.matmul %252, %253, %cst_108 {dimension_numbers = #tpu.dot_dimension_numbers<[1], [0], [0], [1], [0, 0, 1, 1], [], []>} : vector<32x288xf32>, vector<288x256xf32>, vector<32x256xf32> -> vector<32x256xf32>
    %255 = vector.broadcast %178 : vector<32x1xf32> to vector<32x256xf32>
    %256 = arith.addf %254, %255 : vector<32x256xf32>
    %cst_109 = arith.constant 0.000000e+00 : f32
    %257 = vector.broadcast %cst_109 : f32 to vector<32x256xf32>
    %258 = arith.maximumf %256, %257 : vector<32x256xf32>
    %cst_110 = arith.constant 0.000000e+00 : f32
    %259 = vector.broadcast %cst_110 : f32 to vector<32x256xf32>
    %c17_i32_111 = arith.constant 17 : i32
    %260 = tpu.dynamic_rotate %258 by %c17_i32_111 dim 1 : vector<32x256xf32>, i32 -> vector<32x256xf32>
    %261 = vector.broadcast %27 : vector<1x256xf32> to vector<32x256xf32>
    %262 = arith.mulf %260, %261 : vector<32x256xf32>
    %c0_112 = arith.constant 0 : index
    %c0_113 = arith.constant 0 : index
    %263 = vector.load %arg4[%c0_112, %c0_113] : memref<288x1xf32, #tpu.memory_space<vmem>>, vector<32x1xf32>
    %264 = vector.broadcast %263 : vector<32x1xf32> to vector<32x256xf32>
    %265 = arith.mulf %262, %264 : vector<32x256xf32>
    %266 = arith.addf %259, %265 : vector<32x256xf32>
    %c16_i32_114 = arith.constant 16 : i32
    %267 = tpu.dynamic_rotate %258 by %c16_i32_114 dim 1 : vector<32x256xf32>, i32 -> vector<32x256xf32>
    %268 = vector.broadcast %48 : vector<1x256xf32> to vector<32x256xf32>
    %269 = arith.mulf %267, %268 : vector<32x256xf32>
    %c32_115 = arith.constant 32 : index
    %c0_116 = arith.constant 0 : index
    %270 = vector.load %arg4[%c32_115, %c0_116] : memref<288x1xf32, #tpu.memory_space<vmem>>, vector<32x1xf32>
    %271 = vector.broadcast %270 : vector<32x1xf32> to vector<32x256xf32>
    %272 = arith.mulf %269, %271 : vector<32x256xf32>
    %273 = arith.addf %266, %272 : vector<32x256xf32>
    %c15_i32_117 = arith.constant 15 : i32
    %274 = tpu.dynamic_rotate %258 by %c15_i32_117 dim 1 : vector<32x256xf32>, i32 -> vector<32x256xf32>
    %275 = vector.broadcast %69 : vector<1x256xf32> to vector<32x256xf32>
    %276 = arith.mulf %274, %275 : vector<32x256xf32>
    %c64_118 = arith.constant 64 : index
    %c0_119 = arith.constant 0 : index
    %277 = vector.load %arg4[%c64_118, %c0_119] : memref<288x1xf32, #tpu.memory_space<vmem>>, vector<32x1xf32>
    %278 = vector.broadcast %277 : vector<32x1xf32> to vector<32x256xf32>
    %279 = arith.mulf %276, %278 : vector<32x256xf32>
    %280 = arith.addf %273, %279 : vector<32x256xf32>
    %c1_i32_120 = arith.constant 1 : i32
    %281 = tpu.dynamic_rotate %258 by %c1_i32_120 dim 1 : vector<32x256xf32>, i32 -> vector<32x256xf32>
    %282 = vector.broadcast %90 : vector<1x256xf32> to vector<32x256xf32>
    %283 = arith.mulf %281, %282 : vector<32x256xf32>
    %c96_121 = arith.constant 96 : index
    %c0_122 = arith.constant 0 : index
    %284 = vector.load %arg4[%c96_121, %c0_122] : memref<288x1xf32, #tpu.memory_space<vmem>>, vector<32x1xf32>
    %285 = vector.broadcast %284 : vector<32x1xf32> to vector<32x256xf32>
    %286 = arith.mulf %283, %285 : vector<32x256xf32>
    %287 = arith.addf %280, %286 : vector<32x256xf32>
    %c128_123 = arith.constant 128 : index
    %c0_124 = arith.constant 0 : index
    %288 = vector.load %arg4[%c128_123, %c0_124] : memref<288x1xf32, #tpu.memory_space<vmem>>, vector<32x1xf32>
    %289 = vector.broadcast %288 : vector<32x1xf32> to vector<32x256xf32>
    %290 = arith.mulf %258, %289 : vector<32x256xf32>
    %291 = arith.addf %287, %290 : vector<32x256xf32>
    %c255_i32_125 = arith.constant 255 : i32
    %292 = tpu.dynamic_rotate %258 by %c255_i32_125 dim 1 : vector<32x256xf32>, i32 -> vector<32x256xf32>
    %293 = vector.broadcast %111 : vector<1x256xf32> to vector<32x256xf32>
    %294 = arith.mulf %292, %293 : vector<32x256xf32>
    %c160_126 = arith.constant 160 : index
    %c0_127 = arith.constant 0 : index
    %295 = vector.load %arg4[%c160_126, %c0_127] : memref<288x1xf32, #tpu.memory_space<vmem>>, vector<32x1xf32>
    %296 = vector.broadcast %295 : vector<32x1xf32> to vector<32x256xf32>
    %297 = arith.mulf %294, %296 : vector<32x256xf32>
    %298 = arith.addf %291, %297 : vector<32x256xf32>
    %c241_i32_128 = arith.constant 241 : i32
    %299 = tpu.dynamic_rotate %258 by %c241_i32_128 dim 1 : vector<32x256xf32>, i32 -> vector<32x256xf32>
    %300 = vector.broadcast %132 : vector<1x256xf32> to vector<32x256xf32>
    %301 = arith.mulf %299, %300 : vector<32x256xf32>
    %c192_129 = arith.constant 192 : index
    %c0_130 = arith.constant 0 : index
    %302 = vector.load %arg4[%c192_129, %c0_130] : memref<288x1xf32, #tpu.memory_space<vmem>>, vector<32x1xf32>
    %303 = vector.broadcast %302 : vector<32x1xf32> to vector<32x256xf32>
    %304 = arith.mulf %301, %303 : vector<32x256xf32>
    %305 = arith.addf %298, %304 : vector<32x256xf32>
    %c240_i32_131 = arith.constant 240 : i32
    %306 = tpu.dynamic_rotate %258 by %c240_i32_131 dim 1 : vector<32x256xf32>, i32 -> vector<32x256xf32>
    %307 = vector.broadcast %153 : vector<1x256xf32> to vector<32x256xf32>
    %308 = arith.mulf %306, %307 : vector<32x256xf32>
    %c224_132 = arith.constant 224 : index
    %c0_133 = arith.constant 0 : index
    %309 = vector.load %arg4[%c224_132, %c0_133] : memref<288x1xf32, #tpu.memory_space<vmem>>, vector<32x1xf32>
    %310 = vector.broadcast %309 : vector<32x1xf32> to vector<32x256xf32>
    %311 = arith.mulf %308, %310 : vector<32x256xf32>
    %312 = arith.addf %305, %311 : vector<32x256xf32>
    %c239_i32_134 = arith.constant 239 : i32
    %313 = tpu.dynamic_rotate %258 by %c239_i32_134 dim 1 : vector<32x256xf32>, i32 -> vector<32x256xf32>
    %314 = vector.broadcast %174 : vector<1x256xf32> to vector<32x256xf32>
    %315 = arith.mulf %313, %314 : vector<32x256xf32>
    %c256_135 = arith.constant 256 : index
    %c0_136 = arith.constant 0 : index
    %316 = vector.load %arg4[%c256_135, %c0_136] : memref<288x1xf32, #tpu.memory_space<vmem>>, vector<32x1xf32>
    %317 = vector.broadcast %316 : vector<32x1xf32> to vector<32x256xf32>
    %318 = arith.mulf %315, %317 : vector<32x256xf32>
    %319 = arith.addf %312, %318 : vector<32x256xf32>
    %cst_137 = arith.constant dense<0.000000e+00> : vector<256xf32>
    %320 = vector.multi_reduction <add>, %319, %cst_137 [0] : vector<32x256xf32> to vector<256xf32>
    %321 = vector.shape_cast %320 : vector<256xf32> to vector<1x256xf32>
    %c0_138 = arith.constant 0 : index
    %c0_139 = arith.constant 0 : index
    %322 = vector.load %arg6[%c0_138, %c0_139] : memref<1x1xf32, #tpu.memory_space<vmem>>, vector<1x1xf32>
    %323 = vector.broadcast %322 : vector<1x1xf32> to vector<1x256xf32>
    %324 = arith.addf %321, %323 : vector<1x256xf32>
    %c0_140 = arith.constant 0 : index
    %c0_141 = arith.constant 0 : index
    %c0_142 = arith.constant 0 : index
    %325 = vector.load %arg7[%c0_140, %c0_141, %c0_142] : memref<1x1x256xf32, #tpu.memory_space<vmem>>, vector<1x1x256xf32>
    %326 = vector.shape_cast %325 : vector<1x1x256xf32> to vector<1x256xf32>
    %327 = vector.shape_cast %324 : vector<1x256xf32> to vector<1x1x256xf32>
    tpu.vector_store %arg7[%c0_140, %c0_141, %c0_142], %327 {strides = array<i32>} : memref<1x1x256xf32, #tpu.memory_space<vmem>>, vector<1x1x256xf32>,
    return
  }
  func.func @transform_0(%arg0: i32) -> (i32, i32, i32) {
    %c0_i32 = arith.constant 0 : i32
    %c0_i32_0 = arith.constant 0 : i32
    %c0_i32_1 = arith.constant 0 : i32
    return %arg0, %c0_i32, %c0_i32_0 : i32, i32, i32
  }
  func.func @transform_1(%arg0: i32) -> (i32, i32) {
    %c0_i32 = arith.constant 0 : i32
    %c0_i32_0 = arith.constant 0 : i32
    %c0_i32_1 = arith.constant 0 : i32
    return %c0_i32, %c0_i32_0 : i32, i32
  }
  func.func @transform_2(%arg0: i32) -> (i32, i32) {
    %c0_i32 = arith.constant 0 : i32
    %c0_i32_0 = arith.constant 0 : i32
    %c0_i32_1 = arith.constant 0 : i32
    return %c0_i32, %c0_i32_0 : i32, i32
  }
  func.func @transform_3(%arg0: i32) -> (i32, i32) {
    %c0_i32 = arith.constant 0 : i32
    %c0_i32_0 = arith.constant 0 : i32
    %c0_i32_1 = arith.constant 0 : i32
    return %c0_i32, %c0_i32_0 : i32, i32
  }
  func.func @transform_4(%arg0: i32) -> (i32, i32) {
    %c0_i32 = arith.constant 0 : i32
    %c0_i32_0 = arith.constant 0 : i32
    %c0_i32_1 = arith.constant 0 : i32
    return %c0_i32, %c0_i32_0 : i32, i32
  }
  func.func @transform_5(%arg0: i32) -> (i32, i32) {
    %c0_i32 = arith.constant 0 : i32
    %c0_i32_0 = arith.constant 0 : i32
    %c0_i32_1 = arith.constant 0 : i32
    return %c0_i32, %c0_i32_0 : i32, i32
  }
  func.func @transform_6(%arg0: i32) -> (i32, i32, i32) {
    %c0_i32 = arith.constant 0 : i32
    %c0_i32_0 = arith.constant 0 : i32
    %c0_i32_1 = arith.constant 0 : i32
    return %arg0, %c0_i32, %c0_i32_0 : i32, i32, i32
  }
}

</mosaic_0001>

<llo_original>
// kernel: logit_classification_head.1
$region0: #{logit_classification_head.1}
  #allocation0 [shape = 'u32[]', space=smem, size = 0x4, offset = 0x4, fixed_abs, tag = 'smem constant byte address 0x4 - core index']
  #allocation1 [shape = 'u32[72,128]{1,0:T(1,128)}', space=vmem, size = 0x9000, scoped, tag = 'internal scratch']
  #allocation2 [shape = 'f32[288,256]{1,0:T(8,128)}', space=vmem, size = 0x48000, scoped, tag = 'scratch operand']
  #allocation3 [shape = 'f32[1,1]{1,0:T(1,128)S(1)}', space=vmem, size = 0x200, scoped, tag = 'scoped memory for logit_classification_head.1']
  %s0 = inlined_call_operand.vmem [shape: f32[2,8,256], index: 0, kind: input, shape index: {}]
  %s1 = inlined_call_operand.vmem [shape: f32[32,72], index: 1, kind: input, shape index: {}]
  %s2 = inlined_call_operand.vmem [shape: f32[32,288], index: 2, kind: input, shape index: {}]
  %s3 = inlined_call_operand.vmem [shape: f32[288,1], index: 3, kind: input, shape index: {}]
  %s4 = inlined_call_operand.vmem [shape: f32[32,2], index: 4, kind: input, shape index: {}]
  %s5 = inlined_call_operand.<no memory space> [shape: f32[1,1], index: 5, kind: input, shape index: {}]
  %s6 = inlined_call_operand.vmem [shape: f32[2,1,256], index: 6, kind: output, shape index: {}]
  %s7 = sld [smem:[#allocation0]]
  $region57: #{logit_classification_head.1} parent=0
    _
  %s9 = ssub.s32 1, %s7
  %s10 = scalar_select 0, %s9, %s7
  %v11 = vstv %s5
  %12 = vst [vmem:[#allocation3] sm:$0x1] %v11
  loop: start=0, step=1, limit=4
  $region2: #{logit_classification_head.1} parent=0 // loop_pre_header
    _
  $region3: #{logit_classification_head.1} parent=0 // loop_header
    %s14 = sphi 0, %s18
    %p15 = scmp.ge.s32.totalorder %s14, 4
    %s24 = sphi 0, %s26
    %s27 = sphi 0, %s24
    %s28 = sphi 0, %s27
    %s44 = sphi 0, %s28
    %s48 = sphi 0, %s48
    %s50 = sphi 0, %s48
    %s51 = sphi 0, %s50
    %s65 = sphi 0, %s51
    %s69 = sphi 0, %s69
    %s71 = sphi 0, %s69
    %s72 = sphi 0, %s71
    %s86 = sphi 0, %s72
    %s90 = sphi 0, %s90
    %s92 = sphi 0, %s90
    %s93 = sphi 0, %s92
    %s107 = sphi 0, %s93
    %s111 = sphi 0, %s111
    %s113 = sphi 0, %s111
    %s114 = sphi 0, %s113
    %s128 = sphi 0, %s114
    %s132 = sphi 0, %s132
    %s134 = sphi 0, %s132
    %s135 = sphi 0, %s134
    %s149 = sphi 0, %s135
    %s155 = sphi 0, %s157
    %s158 = sphi 0, %s155
    %s159 = sphi 0, %s158
    %s175 = sphi 0, %s159
  $region4: #{logit_classification_head.1} parent=0 // loop_header_branch
    %17 = sbr.rel (%p15) target = $region8
  $region5: #{logit_classification_head.1} parent=0 // loop_body
    %s19 = ssub.s32 %s14, 1
    %s20 = ssub.s32 %s14, 2
    %s21 = sadd.s32 %s14, 1
    %s22 = ssub.s32 %s14, %s21
    %p23 = scmp.eq.s32.totalorder %s22, 0
    %s25 = sadd.s32 %s24, 1
    %s26 = scalar_select %p23, %s24, %s25
    %p29 = pneg %p23
    %p30 = scmp.eq.s32.totalorder %s14, 1
    %p31 = por %p29, %p30
    %p32 = scmp.ne.s32.totalorder %s24, %s27
    %p33 = scmp.eq.s32.totalorder %s14, 0
    %p34 = por %p32, %p33
    %p35 = scmp.ne.s32.totalorder %s24, %s27
    %p36 = scmp.eq.s32.totalorder %s19, 1
    %p37 = por %p35, %p36
    %p38 = scmp.ne.s32.totalorder %s27, %s28
    %p39 = scmp.eq.s32.totalorder %s19, 0
    %p40 = por %p38, %p39
    %p41 = scmp.ne.s32.totalorder %s27, %s28
    %p42 = scmp.eq.s32.totalorder %s20, 1
    %p43 = por %p41, %p42
    %p45 = scmp.ne.s32.totalorder %s28, %s44
    %p46 = scmp.eq.s32.totalorder %s20, 0
    %p47 = por %p45, %p46
    %s49 = sadd.s32 %s48, 1
    %p52 = scmp.eq.s32.totalorder %s14, 1
    %p53 = scmp.ne.s32.totalorder %s48, %s50
    %p54 = scmp.eq.s32.totalorder %s14, 0
    %p55 = por %p53, %p54
    %p56 = scmp.ne.s32.totalorder %s48, %s50
    %p57 = scmp.eq.s32.totalorder %s19, 1
    %p58 = por %p56, %p57
    %p59 = scmp.ne.s32.totalorder %s50, %s51
    %p60 = scmp.eq.s32.totalorder %s19, 0
    %p61 = por %p59, %p60
    %p62 = scmp.ne.s32.totalorder %s50, %s51
    %p63 = scmp.eq.s32.totalorder %s20, 1
    %p64 = por %p62, %p63
    %p66 = scmp.ne.s32.totalorder %s51, %s65
    %p67 = scmp.eq.s32.totalorder %s20, 0
    %p68 = por %p66, %p67
    %s70 = sadd.s32 %s69, 1
    %p73 = scmp.eq.s32.totalorder %s14, 1
    %p74 = scmp.ne.s32.totalorder %s69, %s71
    %p75 = scmp.eq.s32.totalorder %s14, 0
    %p76 = por %p74, %p75
    %p77 = scmp.ne.s32.totalorder %s69, %s71
    %p78 = scmp.eq.s32.totalorder %s19, 1
    %p79 = por %p77, %p78
    %p80 = scmp.ne.s32.totalorder %s71, %s72
    %p81 = scmp.eq.s32.totalorder %s19, 0
    %p82 = por %p80, %p81
    %p83 = scmp.ne.s32.totalorder %s71, %s72
    %p84 = scmp.eq.s32.totalorder %s20, 1
    %p85 = por %p83, %p84
    %p87 = scmp.ne.s32.totalorder %s72, %s86
    %p88 = scmp.eq.s32.totalorder %s20, 0
    %p89 = por %p87, %p88
    %s91 = sadd.s32 %s90, 1
    %p94 = scmp.eq.s32.totalorder %s14, 1
    %p95 = scmp.ne.s32.totalorder %s90, %s92
    %p96 = scmp.eq.s32.totalorder %s14, 0
    %p97 = por %p95, %p96
    %p98 = scmp.ne.s32.totalorder %s90, %s92
    %p99 = scmp.eq.s32.totalorder %s19, 1
    %p100 = por %p98, %p99
    %p101 = scmp.ne.s32.totalorder %s92, %s93
    %p102 = scmp.eq.s32.totalorder %s19, 0
    %p103 = por %p101, %p102
    %p104 = scmp.ne.s32.totalorder %s92, %s93
    %p105 = scmp.eq.s32.totalorder %s20, 1
    %p106 = por %p104, %p105
    %p108 = scmp.ne.s32.totalorder %s93, %s107
    %p109 = scmp.eq.s32.totalorder %s20, 0
    %p110 = por %p108, %p109
    %s112 = sadd.s32 %s111, 1
    %p115 = scmp.eq.s32.totalorder %s14, 1
    %p116 = scmp.ne.s32.totalorder %s111, %s113
    %p117 = scmp.eq.s32.totalorder %s14, 0
    %p118 = por %p116, %p117
    %p119 = scmp.ne.s32.totalorder %s111, %s113
    %p120 = scmp.eq.s32.totalorder %s19, 1
    %p121 = por %p119, %p120
    %p122 = scmp.ne.s32.totalorder %s113, %s114
    %p123 = scmp.eq.s32.totalorder %s19, 0
    %p124 = por %p122, %p123
    %p125 = scmp.ne.s32.totalorder %s113, %s114
    %p126 = scmp.eq.s32.totalorder %s20, 1
    %p127 = por %p125, %p126
    %p129 = scmp.ne.s32.totalorder %s114, %s128
    %p130 = scmp.eq.s32.totalorder %s20, 0
    %p131 = por %p129, %p130
    %s133 = sadd.s32 %s132, 1
    %p136 = scmp.eq.s32.totalorder %s14, 1
    %p137 = scmp.ne.s32.totalorder %s132, %s134
    %p138 = scmp.eq.s32.totalorder %s14, 0
    %p139 = por %p137, %p138
    %p140 = scmp.ne.s32.totalorder %s132, %s134
    %p141 = scmp.eq.s32.totalorder %s19, 1
    %p142 = por %p140, %p141
    %p143 = scmp.ne.s32.totalorder %s134, %s135
    %p144 = scmp.eq.s32.totalorder %s19, 0
    %p145 = por %p143, %p144
    %p146 = scmp.ne.s32.totalorder %s134, %s135
    %p147 = scmp.eq.s32.totalorder %s20, 1
    %p148 = por %p146, %p147
    %p150 = scmp.ne.s32.totalorder %s135, %s149
    %p151 = scmp.eq.s32.totalorder %s20, 0
    %p152 = por %p150, %p151
    %s153 = ssub.s32 %s14, %s21
    %p154 = scmp.eq.s32.totalorder %s153, 0
    %s156 = sadd.s32 %s155, 1
    %s157 = scalar_select %p154, %s155, %s156
    %p160 = pneg %p154
    %p161 = scmp.eq.s32.totalorder %s14, 1
    %p162 = por %p160, %p161
    %p163 = scmp.ne.s32.totalorder %s155, %s158
    %p164 = scmp.eq.s32.totalorder %s14, 0
    %p165 = por %p163, %p164
    %p166 = scmp.ne.s32.totalorder %s155, %s158
    %p167 = scmp.eq.s32.totalorder %s19, 1
    %p168 = por %p166, %p167
    %p169 = scmp.ne.s32.totalorder %s158, %s159
    %p170 = scmp.eq.s32.totalorder %s19, 0
    %p171 = por %p169, %p170
    %p172 = scmp.ne.s32.totalorder %s158, %s159
    %p173 = scmp.eq.s32.totalorder %s20, 1
    %p174 = por %p172, %p173
    %p176 = scmp.ne.s32.totalorder %s159, %s175
    %p177 = scmp.eq.s32.totalorder %s20, 0
    %p178 = por %p176, %p177
    %p179 = scmp.le.s32.totalorder 1, %s14
    %p180 = scmp.lt.s32.totalorder %s14, 3
    %p181 = pnand %p179, %p180
    %p182 = pneg %p181
    // Predicated region
    $region9: #{logit_classification_head.1} parent=5 // pred_check
      _
    $region10: #{logit_classification_head.1} parent=5 // pred_check_branch
      %184 = sbr.rel (%p181) target = $region12
    $region11: #{logit_classification_head.1} parent=5 // pred_region
      %s185 = ssub.s32 %s14, 1
      // Predicated region
      $region13: #{logit_classification_head.1} parent=11 // pred_check
        %p186 = pneg %p61
      $region14: #{logit_classification_head.1} parent=11 // pred_check_branch
        %188 = sbr.rel (%p186) target = $region16
      $region15: #{logit_classification_head.1} parent=11 // pred_region
        _
      $region16: #{logit_classification_head.1} parent=11 // pred_fallthru
        _
      // Predicated region
      $region17: #{logit_classification_head.1} parent=11 // pred_check
        %p189 = pneg %p82
      $region18: #{logit_classification_head.1} parent=11 // pred_check_branch
        %191 = sbr.rel (%p189) target = $region20
      $region19: #{logit_classification_head.1} parent=11 // pred_region
        _
      $region20: #{logit_classification_head.1} parent=11 // pred_fallthru
        _
      // Predicated region
      $region21: #{logit_classification_head.1} parent=11 // pred_check
        %p192 = pneg %p103
      $region22: #{logit_classification_head.1} parent=11 // pred_check_branch
        %194 = sbr.rel (%p192) target = $region24
      $region23: #{logit_classification_head.1} parent=11 // pred_region
        _
      $region24: #{logit_classification_head.1} parent=11 // pred_fallthru
        _
      // Predicated region
      $region25: #{logit_classification_head.1} parent=11 // pred_check
        %p195 = pneg %p124
      $region26: #{logit_classification_head.1} parent=11 // pred_check_branch
        %197 = sbr.rel (%p195) target = $region28
      $region27: #{logit_classification_head.1} parent=11 // pred_region
        _
      $region28: #{logit_classification_head.1} parent=11 // pred_fallthru
        _
      // Predicated region
      $region29: #{logit_classification_head.1} parent=11 // pred_check
        %p198 = pneg %p145
      $region30: #{logit_classification_head.1} parent=11 // pred_check_branch
        %200 = sbr.rel (%p198) target = $region32
      $region31: #{logit_classification_head.1} parent=11 // pred_region
        _
      $region32: #{logit_classification_head.1} parent=11 // pred_fallthru
        _
    $region12: #{logit_classification_head.1} parent=5 // pred_fallthru
      _
    %p201 = scmp.lt.s32.totalorder %s14, 2
    // Predicated region
    $region33: #{logit_classification_head.1} parent=5 // pred_check
      %p202 = pneg %p201
    $region34: #{logit_classification_head.1} parent=5 // pred_check_branch
      %204 = sbr.rel (%p202) target = $region36
    $region35: #{logit_classification_head.1} parent=5 // pred_region
      // Predicated region
      $region37: #{logit_classification_head.1} parent=35 // pred_check
        %p205 = pneg %p34
      $region38: #{logit_classification_head.1} parent=35 // pred_check_branch
        %207 = sbr.rel (%p205) target = $region40
      $region39: #{logit_classification_head.1} parent=35 // pred_region
        %p208 = scmp.lt.s32.totalorder %s14, 1
        %s209 = scalar_select %p208, %s14, 1
        %s210 = smul.addr %s209, 2
        %s211 = smul.addr %s210, 8
        %s212 = scalar_lea.vmem %s0, %s211
      $region40: #{logit_classification_head.1} parent=35 // pred_fallthru
        _
    $region36: #{logit_classification_head.1} parent=5 // pred_fallthru
      _
    %p213 = scmp.le.s32.totalorder 1, %s14
    %p214 = scmp.lt.s32.totalorder %s14, 3
    %p215 = pnand %p213, %p214
    %p216 = pneg %p215
    // Predicated region
    $region41: #{logit_classification_head.1} parent=5 // pred_check
      _
    $region42: #{logit_classification_head.1} parent=5 // pred_check_branch
      %218 = sbr.rel (%p215) target = $region44
    $region43: #{logit_classification_head.1} parent=5 // pred_region
      %s219 = ssub.s32 %s14, 1
      %p220 = scmp.lt.s32.totalorder %s19, 1
      %s221 = scalar_select %p220, %s19, 1
      %s222 = smul.addr %s221, 2
      %s223 = smul.addr %s222, 8
      %s224 = scalar_lea.vmem %s0, %s223
      %p225 = pneg %p40
      %p226 = pneg %p37
      %p227 = pneg %p61
      %p228 = pneg %p58
      %p229 = pneg %p82
      %p230 = pneg %p79
      %p231 = pneg %p103
      %p232 = pneg %p100
      %p233 = pneg %p124
      %p234 = pneg %p121
      %p235 = pneg %p145
      %p236 = pneg %p142
      %p237 = pneg %p171
      %p238 = pneg %p168
      %p239 = scmp.lt.s32.totalorder %s19, 1
      %s240 = scalar_select %p239, %s19, 1
      %s241 = smul.addr %s240, 2
      %s242 = scalar_lea.vmem %s6, %s241
      %p243 = scmp.lt.s32.totalorder %s19, 1
      %s244 = scalar_select %p243, %s19, 1
      %s245 = smul.addr %s244, 2
      %s246 = smul.addr %s245, 8
      %s247 = scalar_lea.vmem %s0, %s246
      %p248 = scmp.lt.s32.totalorder %s19, 1
      %s249 = scalar_select %p248, %s19, 1
      %s250 = smul.addr %s249, 2
      %s251 = scalar_lea.vmem %s6, %s250
      %v252 = vlaneseq
      %v253 = vand.u32 %v252, 127
      %v254 = vadd.s32 %v253, 128
      %v255 = vand.u32 %v253, 255
      %v256 = vand.u32 %v254, 255
      %v257 = vand.u32 %v255, 15
      %v258 = vand.u32 %v256, 15
      %v259 = vshra.s32 %v255, 4
      %v260 = vshra.s32 %v256, 4
      %v261 = vadd.s32 %v259, 4294967295
      %v262 = vadd.s32 %v260, 4294967295
      %vm263 = vcmp.ge.s32.totalorder %v261, 0
      %vm264 = vcmp.ge.s32.totalorder %v262, 0
      %vm265 = vcmp.lt.s32.totalorder %v261, 16
      %vm266 = vcmp.lt.s32.totalorder %v262, 16
      %vm267 = vmand %vm263, %vm265
      %vm268 = vmand %vm264, %vm266
      %v269 = vadd.s32 %v257, 4294967295
      %v270 = vadd.s32 %v258, 4294967295
      %vm271 = vcmp.ge.s32.totalorder %v269, 0
      %vm272 = vcmp.ge.s32.totalorder %v270, 0
      %vm273 = vmand %vm267, %vm271
      %vm274 = vmand %vm268, %vm272
      %vm275 = vcmp.lt.s32.totalorder %v269, 16
      %vm276 = vcmp.lt.s32.totalorder %v270, 16
      %vm277 = vmand %vm273, %vm275
      %vm278 = vmand %vm274, %vm276
      %v279 = vsel %vm277, 1, 0
      %v280 = vsel %vm278, 1, 0
      %v281 = vcvt.s32.f32 %v279
      %v282 = vcvt.s32.f32 %v280
      %vm283 = vcmp.ge.s32.totalorder %v257, 0
      %vm284 = vcmp.ge.s32.totalorder %v258, 0
      %vm285 = vmand %vm267, %vm283
      %vm286 = vmand %vm268, %vm284
      %vm287 = vcmp.lt.s32.totalorder %v257, 16
      %vm288 = vcmp.lt.s32.totalorder %v258, 16
      %vm289 = vmand %vm285, %vm287
      %vm290 = vmand %vm286, %vm288
      %v291 = vsel %vm289, 1, 0
      %v292 = vsel %vm290, 1, 0
      %v293 = vcvt.s32.f32 %v291
      %v294 = vcvt.s32.f32 %v292
      %v295 = vadd.s32 %v257, 1
      %v296 = vadd.s32 %v258, 1
      %vm297 = vcmp.ge.s32.totalorder %v295, 0
      %vm298 = vcmp.ge.s32.totalorder %v296, 0
      %vm299 = vmand %vm267, %vm297
      %vm300 = vmand %vm268, %vm298
      %vm301 = vcmp.lt.s32.totalorder %v295, 16
      %vm302 = vcmp.lt.s32.totalorder %v296, 16
      %vm303 = vmand %vm299, %vm301
      %vm304 = vmand %vm300, %vm302
      %v305 = vsel %vm303, 1, 0
      %v306 = vsel %vm304, 1, 0
      %v307 = vcvt.s32.f32 %v305
      %v308 = vcvt.s32.f32 %v306
      %vm309 = vcmp.ge.s32.totalorder %v259, 0
      %vm310 = vcmp.ge.s32.totalorder %v260, 0
      %vm311 = vcmp.lt.s32.totalorder %v259, 16
      %vm312 = vcmp.lt.s32.totalorder %v260, 16
      %vm313 = vmand %vm309, %vm311
      %vm314 = vmand %vm310, %vm312
      %vm315 = vmand %vm313, %vm271
      %vm316 = vmand %vm314, %vm272
      %vm317 = vmand %vm315, %vm275
      %vm318 = vmand %vm316, %vm276
      %v319 = vsel %vm317, 1, 0
      %v320 = vsel %vm318, 1, 0
      %v321 = vcvt.s32.f32 %v319
      %v322 = vcvt.s32.f32 %v320
      %vm323 = vmand %vm313, %vm297
      %vm324 = vmand %vm314, %vm298
      %vm325 = vmand %vm323, %vm301
      %vm326 = vmand %vm324, %vm302
      %v327 = vsel %vm325, 1, 0
      %v328 = vsel %vm326, 1, 0
      %v329 = vcvt.s32.f32 %v327
      %v330 = vcvt.s32.f32 %v328
      %v331 = vadd.s32 %v259, 1
      %v332 = vadd.s32 %v260, 1
      %vm333 = vcmp.ge.s32.totalorder %v331, 0
      %vm334 = vcmp.ge.s32.totalorder %v332, 0
      %vm335 = vcmp.lt.s32.totalorder %v331, 16
      %vm336 = vcmp.lt.s32.totalorder %v332, 16
      %vm337 = vmand %vm333, %vm335
      %vm338 = vmand %vm334, %vm336
      %vm339 = vmand %vm337, %vm271
      %vm340 = vmand %vm338, %vm272
      %vm341 = vmand %vm339, %vm275
      %vm342 = vmand %vm340, %vm276
      %v343 = vsel %vm341, 1, 0
      %v344 = vsel %vm342, 1, 0
      %v345 = vcvt.s32.f32 %v343
      %v346 = vcvt.s32.f32 %v344
      %vm347 = vmand %vm337, %vm283
      %vm348 = vmand %vm338, %vm284
      %vm349 = vmand %vm347, %vm287
      %vm350 = vmand %vm348, %vm288
      %v351 = vsel %vm349, 1, 0
      %v352 = vsel %vm350, 1, 0
      %v353 = vcvt.s32.f32 %v351
      %v354 = vcvt.s32.f32 %v352
      %vm355 = vmand %vm337, %vm297
      %vm356 = vmand %vm338, %vm298
      %vm357 = vmand %vm355, %vm301
      %vm358 = vmand %vm356, %vm302
      %v359 = vsel %vm357, 1, 0
      %v360 = vsel %vm358, 1, 0
      %v361 = vcvt.s32.f32 %v359
      %v362 = vcvt.s32.f32 %v360
      %v363 = vld [vmem:[%s247] sm:$0xff]
      %v364 = vld [vmem:[%s247 + $0x8] sm:$0xff]
      %v365 = vld [vmem:[%s4] sm:$0xff]
      %v366 = vld [vmem:[%s4 + $0x8] sm:$0xff]
      %v367 = vld [vmem:[%s4 + $0x10] sm:$0xff]
      %v368 = vld [vmem:[%s4 + $0x18] sm:$0xff]
      %369 = vrot.lane.b32.xlu0 %v363, 17
      %v370 = vpop.permute.xlu0 %369
      %371 = vrot.lane.b32.xlu0 %v364, 17
      %v372 = vpop.permute.xlu0 %371
      %vm373 = vcmp.lt.s32.totalorder %v253, 17
      %v374 = vsel %vm373, %v370, %v372
      %v375 = vsel %vm373, %v372, %v370
      %v376 = vmul.f32 %v375, %v281
      %v377 = vmul.f32 %v374, %v282
      %378 = vst [vmem:[#allocation2] sm:$0xff] %v376
      %379 = vst [vmem:[#allocation2 + $0x8] sm:$0xff] %v377
      %380 = vrot.lane.b32.xlu0 %v363, 16
      %v381 = vpop.permute.xlu0 %380
      %382 = vrot.lane.b32.xlu0 %v364, 16
      %v383 = vpop.permute.xlu0 %382
      %vm384 = vcmp.lt.s32.totalorder %v253, 16
      %v385 = vsel %vm384, %v381, %v383
      %v386 = vsel %vm384, %v383, %v381
      %v387 = vmul.f32 %v386, %v293
      %v388 = vmul.f32 %v385, %v294
      %389 = vst [vmem:[#allocation2 + $0x10] sm:$0xff] %v387
      %390 = vst [vmem:[#allocation2 + $0x18] sm:$0xff] %v388
      %391 = vrot.lane.b32.xlu0 %v363, 15
      %v392 = vpop.permute.xlu0 %391
      %393 = vrot.lane.b32.xlu0 %v364, 15
      %v394 = vpop.permute.xlu0 %393
      %vm395 = vcmp.lt.s32.totalorder %v253, 15
      %v396 = vsel %vm395, %v392, %v394
      %v397 = vsel %vm395, %v394, %v392
      %v398 = vmul.f32 %v397, %v307
      %v399 = vmul.f32 %v396, %v308
      %400 = vst [vmem:[#allocation2 + $0x20] sm:$0xff] %v398
      %401 = vst [vmem:[#allocation2 + $0x28] sm:$0xff] %v399
      %402 = vrot.lane.b32.xlu0 %v363, 1
      %v403 = vpop.permute.xlu0 %402
      %404 = vrot.lane.b32.xlu0 %v364, 1
      %v405 = vpop.permute.xlu0 %404
      %vm406 = vcmp.lt.s32.totalorder %v253, 1
      %v407 = vsel %vm406, %v403, %v405
      %v408 = vsel %vm406, %v405, %v403
      %v409 = vmul.f32 %v408, %v321
      %v410 = vmul.f32 %v407, %v322
      %411 = vst [vmem:[#allocation2 + $0x30] sm:$0xff] %v409
      %412 = vst [vmem:[#allocation2 + $0x38] sm:$0xff] %v410
      %413 = vst [vmem:[#allocation2 + $0x40] sm:$0xff] %v363
      %414 = vst [vmem:[#allocation2 + $0x48] sm:$0xff] %v364
      %415 = vrot.lane.b32.xlu0 %v363, 127
      %v416 = vpop.permute.xlu0 %415
      %417 = vrot.lane.b32.xlu0 %v364, 127
      %v418 = vpop.permute.xlu0 %417
      %vm419 = vcmp.lt.s32.totalorder %v253, 127
      %v420 = vsel %vm419, %v416, %v418
      %v421 = vsel %vm419, %v418, %v416
      %v422 = vmul.f32 %v420, %v329
      %v423 = vmul.f32 %v421, %v330
      %424 = vst [vmem:[#allocation2 + $0x50] sm:$0xff] %v422
      %425 = vst [vmem:[#allocation2 + $0x58] sm:$0xff] %v423
      %426 = vrot.lane.b32.xlu0 %v363, 113
      %v427 = vpop.permute.xlu0 %426
      %428 = vrot.lane.b32.xlu0 %v364, 113
      %v429 = vpop.permute.xlu0 %428
      %vm430 = vcmp.lt.s32.totalorder %v253, 113
      %v431 = vsel %vm430, %v427, %v429
      %v432 = vsel %vm430, %v429, %v427
      %v433 = vmul.f32 %v431, %v345
      %v434 = vmul.f32 %v432, %v346
      %435 = vst [vmem:[#allocation2 + $0x60] sm:$0xff] %v433
      %436 = vst [vmem:[#allocation2 + $0x68] sm:$0xff] %v434
      %437 = vrot.lane.b32.xlu0 %v363, 112
      %v438 = vpop.permute.xlu0 %437
      %439 = vrot.lane.b32.xlu0 %v364, 112
      %v440 = vpop.permute.xlu0 %439
      %vm441 = vcmp.lt.s32.totalorder %v253, 112
      %v442 = vsel %vm441, %v438, %v440
      %v443 = vsel %vm441, %v440, %v438
      %v444 = vmul.f32 %v442, %v353
      %v445 = vmul.f32 %v443, %v354
      %446 = vst [vmem:[#allocation2 + $0x70] sm:$0xff] %v444
      %447 = vst [vmem:[#allocation2 + $0x78] sm:$0xff] %v445
      %448 = vrot.lane.b32.xlu0 %v363, 111
      %v449 = vpop.permute.xlu0 %448
      %450 = vrot.lane.b32.xlu0 %v364, 111
      %v451 = vpop.permute.xlu0 %450
      %vm452 = vcmp.lt.s32.totalorder %v253, 111
      %v453 = vsel %vm452, %v449, %v451
      %v454 = vsel %vm452, %v451, %v449
      %v455 = vmul.f32 %v453, %v361
      %v456 = vmul.f32 %v454, %v362
      %457 = vst [vmem:[#allocation2 + $0x80] sm:$0xff] %v455
      %458 = vst [vmem:[#allocation2 + $0x88] sm:$0xff] %v456
      %v459 = vld [vmem:[%s1] sm:$0xff]
      %v460 = vld [vmem:[%s1 + $0x8] sm:$0xff]
      %v461 = vld [vmem:[%s1 + $0x10] sm:$0xff]
      %v462 = vld [vmem:[%s1 + $0x18] sm:$0xff]
      %v463 = vld [vmem:[#allocation2] sm:$0xff]
      %v464 = vld [vmem:[#allocation2 + $0x8] sm:$0xff]
      %v465 = vld [vmem:[#allocation2 + $0x10] sm:$0xff]
      %v466 = vld [vmem:[#allocation2 + $0x18] sm:$0xff]
      %v467 = vld [vmem:[#allocation2 + $0x20] sm:$0xff]
      %v468 = vld [vmem:[#allocation2 + $0x28] sm:$0xff]
      %v469 = vld [vmem:[#allocation2 + $0x30] sm:$0xff]
      %v470 = vld [vmem:[#allocation2 + $0x38] sm:$0xff]
      %v471 = vld [vmem:[#allocation2 + $0x40] sm:$0xff]
      %v472 = vld [vmem:[#allocation2 + $0x48] sm:$0xff]
      %v473 = vld [vmem:[#allocation2 + $0x50] sm:$0xff]
      %v474 = vld [vmem:[#allocation2 + $0x58] sm:$0xff]
      %v475 = vld [vmem:[#allocation2 + $0x60] sm:$0xff]
      %v476 = vld [vmem:[#allocation2 + $0x68] sm:$0xff]
      %v477 = vld [vmem:[#allocation2 + $0x70] sm:$0xff]
      %v478 = vld [vmem:[#allocation2 + $0x78] sm:$0xff]
      %v479 = vld [vmem:[#allocation2 + $0x80] sm:$0xff]
      %v480 = vld [vmem:[#allocation2 + $0x88] sm:$0xff]
      %482 = vset.pattern.permute.xlu0 0
      %483 = vperm.xlu0 %482, %v365
      %v484 = vpop.permute.xlu0 %483
      %487 = vset.pattern.permute.xlu0 0
      %488 = vperm.xlu0 %487, %v366
      %v489 = vpop.permute.xlu0 %488
      %492 = vset.pattern.permute.xlu0 0
      %493 = vperm.xlu0 %492, %v367
      %v494 = vpop.permute.xlu0 %493
      %497 = vset.pattern.permute.xlu0 0
      %498 = vperm.xlu0 %497, %v368
      %v499 = vpop.permute.xlu0 %498
      %vm501 = vcmask 588800
      %v503 = vsel %vm501, %v459, 0
      %v506 = vsel %vm501, %v460, 0
      %v509 = vsel %vm501, %v461, 0
      %v512 = vsel %vm501, %v462, 0
      %514 = vmatpush.msra.mxu0 0.0
      %515 = vmatpush.msra.mxu0 0.0
      %516 = vmatpush.msra.mxu0 0.0
      %517 = vmatpush.msra.mxu0 0.0
      %518 = vmatpush.msra.mxu0 0.0
      %519 = vmatpush.msra.mxu0 0.0
      %520 = vmatpush.msra.mxu0 0.0
      %521 = vmatpush.msra.mxu0 %v479
      %522 = vmatpush.msra.mxu0 %v477
      %523 = vmatpush.msra.mxu0 %v475
      %524 = vmatpush.msra.mxu0 %v473
      %525 = vmatpush.msra.mxu0 %v471
      %526 = vmatpush.msra.mxu0 %v469
      %527 = vmatpush.msra.mxu0 %v467
      %528 = vmatpush.msra.mxu0 %v465
      %529 = vmatpush.msra.mxu0 %v463
      %530 = vmatmul.f32.gmra.mxu0 %v503
      %v531 = vpop.f32.mrf.mxu0
      %v532 = vadd.f32 %v484, %v531
      %533 = vmatmul.f32.gmra.mxu0 %v506
      %v534 = vpop.f32.mrf.mxu0
      %v535 = vadd.f32 %v489, %v534
      %536 = vmatmul.f32.gmra.mxu0 %v509
      %v537 = vpop.f32.mrf.mxu0
      %v538 = vadd.f32 %v494, %v537
      %539 = vmatmul.f32.gmra.mxu0 %v512
      %v540 = vpop.f32.mrf.mxu0
      %v541 = vadd.f32 %v499, %v540
      %542 = vdwg.mxu0
      %543 = vmatpush.msra.mxu0 0.0
      %544 = vmatpush.msra.mxu0 0.0
      %545 = vmatpush.msra.mxu0 0.0
      %546 = vmatpush.msra.mxu0 0.0
      %547 = vmatpush.msra.mxu0 0.0
      %548 = vmatpush.msra.mxu0 0.0
      %549 = vmatpush.msra.mxu0 0.0
      %550 = vmatpush.msra.mxu0 %v480
      %551 = vmatpush.msra.mxu0 %v478
      %552 = vmatpush.msra.mxu0 %v476
      %553 = vmatpush.msra.mxu0 %v474
      %554 = vmatpush.msra.mxu0 %v472
      %555 = vmatpush.msra.mxu0 %v470
      %556 = vmatpush.msra.mxu0 %v468
      %557 = vmatpush.msra.mxu0 %v466
      %558 = vmatpush.msra.mxu0 %v464
      %559 = vmatmul.f32.gmra.mxu0 %v503
      %v560 = vpop.f32.mrf.mxu0
      %v561 = vadd.f32 %v484, %v560
      %562 = vmatmul.f32.gmra.mxu0 %v506
      %v563 = vpop.f32.mrf.mxu0
      %v564 = vadd.f32 %v489, %v563
      %565 = vmatmul.f32.gmra.mxu0 %v509
      %v566 = vpop.f32.mrf.mxu0
      %v567 = vadd.f32 %v494, %v566
      %568 = vmatmul.f32.gmra.mxu0 %v512
      %v569 = vpop.f32.mrf.mxu0
      %v570 = vadd.f32 %v499, %v569
      %571 = vdwg.mxu0
      %v572 = vmax.f32 %v532, 0.0
      %v573 = vmax.f32 %v561, 0.0
      %v574 = vmax.f32 %v535, 0.0
      %v575 = vmax.f32 %v564, 0.0
      %v576 = vmax.f32 %v538, 0.0
      %v577 = vmax.f32 %v567, 0.0
      %v578 = vmax.f32 %v541, 0.0
      %v579 = vmax.f32 %v570, 0.0
      %580 = vrot.lane.b32.xlu0 %v572, 17
      %v581 = vpop.permute.xlu0 %580
      %582 = vrot.lane.b32.xlu0 %v574, 17
      %v583 = vpop.permute.xlu0 %582
      %584 = vrot.lane.b32.xlu0 %v576, 17
      %v585 = vpop.permute.xlu0 %584
      %586 = vrot.lane.b32.xlu0 %v578, 17
      %v587 = vpop.permute.xlu0 %586
      %588 = vrot.lane.b32.xlu0 %v573, 17
      %v589 = vpop.permute.xlu0 %588
      %590 = vrot.lane.b32.xlu0 %v575, 17
      %v591 = vpop.permute.xlu0 %590
      %592 = vrot.lane.b32.xlu0 %v577, 17
      %v593 = vpop.permute.xlu0 %592
      %594 = vrot.lane.b32.xlu0 %v579, 17
      %v595 = vpop.permute.xlu0 %594
      %v596 = vsel %vm373, %v581, %v589
      %v597 = vsel %vm373, %v583, %v591
      %v598 = vsel %vm373, %v585, %v593
      %v599 = vsel %vm373, %v587, %v595
      %v600 = vsel %vm373, %v589, %v581
      %v601 = vsel %vm373, %v591, %v583
      %v602 = vsel %vm373, %v593, %v585
      %v603 = vsel %vm373, %v595, %v587
      %v604 = vmul.f32 %v600, %v281
      %v605 = vmul.f32 %v596, %v282
      %v606 = vmul.f32 %v601, %v281
      %v607 = vmul.f32 %v597, %v282
      %v608 = vmul.f32 %v602, %v281
      %v609 = vmul.f32 %v598, %v282
      %v610 = vmul.f32 %v603, %v281
      %v611 = vmul.f32 %v599, %v282
      %612 = vst [vmem:[#allocation2] sm:$0xff] %v604
      %613 = vst [vmem:[#allocation2 + $0x8] sm:$0xff] %v605
      %614 = vst [vmem:[#allocation2 + $0x10] sm:$0xff] %v606
      %615 = vst [vmem:[#allocation2 + $0x18] sm:$0xff] %v607
      %616 = vst [vmem:[#allocation2 + $0x20] sm:$0xff] %v608
      %617 = vst [vmem:[#allocation2 + $0x28] sm:$0xff] %v609
      %618 = vst [vmem:[#allocation2 + $0x30] sm:$0xff] %v610
      %619 = vst [vmem:[#allocation2 + $0x38] sm:$0xff] %v611
      %620 = vrot.lane.b32.xlu0 %v572, 16
      %v621 = vpop.permute.xlu0 %620
      %622 = vrot.lane.b32.xlu0 %v574, 16
      %v623 = vpop.permute.xlu0 %622
      %624 = vrot.lane.b32.xlu0 %v576, 16
      %v625 = vpop.permute.xlu0 %624
      %626 = vrot.lane.b32.xlu0 %v578, 16
      %v627 = vpop.permute.xlu0 %626
      %628 = vrot.lane.b32.xlu0 %v573, 16
      %v629 = vpop.permute.xlu0 %628
      %630 = vrot.lane.b32.xlu0 %v575, 16
      %v631 = vpop.permute.xlu0 %630
      %632 = vrot.lane.b32.xlu0 %v577, 16
      %v633 = vpop.permute.xlu0 %632
      %634 = vrot.lane.b32.xlu0 %v579, 16
      %v635 = vpop.permute.xlu0 %634
      %v636 = vsel %vm384, %v621, %v629
      %v637 = vsel %vm384, %v623, %v631
      %v638 = vsel %vm384, %v625, %v633
      %v639 = vsel %vm384, %v627, %v635
      %v640 = vsel %vm384, %v629, %v621
      %v641 = vsel %vm384, %v631, %v623
      %v642 = vsel %vm384, %v633, %v625
      %v643 = vsel %vm384, %v635, %v627
      %v644 = vmul.f32 %v640, %v293
      %v645 = vmul.f32 %v636, %v294
      %v646 = vmul.f32 %v641, %v293
      %v647 = vmul.f32 %v637, %v294
      %v648 = vmul.f32 %v642, %v293
      %v649 = vmul.f32 %v638, %v294
      %v650 = vmul.f32 %v643, %v293
      %v651 = vmul.f32 %v639, %v294
      %652 = vst [vmem:[#allocation2 + $0x40] sm:$0xff] %v644
      %653 = vst [vmem:[#allocation2 + $0x48] sm:$0xff] %v645
      %654 = vst [vmem:[#allocation2 + $0x50] sm:$0xff] %v646
      %655 = vst [vmem:[#allocation2 + $0x58] sm:$0xff] %v647
      %656 = vst [vmem:[#allocation2 + $0x60] sm:$0xff] %v648
      %657 = vst [vmem:[#allocation2 + $0x68] sm:$0xff] %v649
      %658 = vst [vmem:[#allocation2 + $0x70] sm:$0xff] %v650
      %659 = vst [vmem:[#allocation2 + $0x78] sm:$0xff] %v651
      %660 = vrot.lane.b32.xlu0 %v572, 15
      %v661 = vpop.permute.xlu0 %660
      %662 = vrot.lane.b32.xlu0 %v574, 15
      %v663 = vpop.permute.xlu0 %662
      %664 = vrot.lane.b32.xlu0 %v576, 15
      %v665 = vpop.permute.xlu0 %664
      %666 = vrot.lane.b32.xlu0 %v578, 15
      %v667 = vpop.permute.xlu0 %666
      %668 = vrot.lane.b32.xlu0 %v573, 15
      %v669 = vpop.permute.xlu0 %668
      %670 = vrot.lane.b32.xlu0 %v575, 15
      %v671 = vpop.permute.xlu0 %670
      %672 = vrot.lane.b32.xlu0 %v577, 15
      %v673 = vpop.permute.xlu0 %672
      %674 = vrot.lane.b32.xlu0 %v579, 15
      %v675 = vpop.permute.xlu0 %674
      %v676 = vsel %vm395, %v661, %v669
      %v677 = vsel %vm395, %v663, %v671
      %v678 = vsel %vm395, %v665, %v673
      %v679 = vsel %vm395, %v667, %v675
      %v680 = vsel %vm395, %v669, %v661
      %v681 = vsel %vm395, %v671, %v663
      %v682 = vsel %vm395, %v673, %v665
      %v683 = vsel %vm395, %v675, %v667
      %v684 = vmul.f32 %v680, %v307
      %v685 = vmul.f32 %v676, %v308
      %v686 = vmul.f32 %v681, %v307
      %v687 = vmul.f32 %v677, %v308
      %v688 = vmul.f32 %v682, %v307
      %v689 = vmul.f32 %v678, %v308
      %v690 = vmul.f32 %v683, %v307
      %v691 = vmul.f32 %v679, %v308
      %692 = vst [vmem:[#allocation2 + $0x80] sm:$0xff] %v684
      %693 = vst [vmem:[#allocation2 + $0x88] sm:$0xff] %v685
      %694 = vst [vmem:[#allocation2 + $0x90] sm:$0xff] %v686
      %695 = vst [vmem:[#allocation2 + $0x98] sm:$0xff] %v687
      %696 = vst [vmem:[#allocation2 + $0xa0] sm:$0xff] %v688
      %697 = vst [vmem:[#allocation2 + $0xa8] sm:$0xff] %v689
      %698 = vst [vmem:[#allocation2 + $0xb0] sm:$0xff] %v690
      %699 = vst [vmem:[#allocation2 + $0xb8] sm:$0xff] %v691
      %700 = vrot.lane.b32.xlu0 %v572, 1
      %v701 = vpop.permute.xlu0 %700
      %702 = vrot.lane.b32.xlu0 %v574, 1
      %v703 = vpop.permute.xlu0 %702
      %704 = vrot.lane.b32.xlu0 %v576, 1
      %v705 = vpop.permute.xlu0 %704
      %706 = vrot.lane.b32.xlu0 %v578, 1
      %v707 = vpop.permute.xlu0 %706
      %708 = vrot.lane.b32.xlu0 %v573, 1
      %v709 = vpop.permute.xlu0 %708
      %710 = vrot.lane.b32.xlu0 %v575, 1
      %v711 = vpop.permute.xlu0 %710
      %712 = vrot.lane.b32.xlu0 %v577, 1
      %v713 = vpop.permute.xlu0 %712
      %714 = vrot.lane.b32.xlu0 %v579, 1
      %v715 = vpop.permute.xlu0 %714
      %v716 = vsel %vm406, %v701, %v709
      %v717 = vsel %vm406, %v703, %v711
      %v718 = vsel %vm406, %v705, %v713
      %v719 = vsel %vm406, %v707, %v715
      %v720 = vsel %vm406, %v709, %v701
      %v721 = vsel %vm406, %v711, %v703
      %v722 = vsel %vm406, %v713, %v705
      %v723 = vsel %vm406, %v715, %v707
      %v724 = vmul.f32 %v720, %v321
      %v725 = vmul.f32 %v716, %v322
      %v726 = vmul.f32 %v721, %v321
      %v727 = vmul.f32 %v717, %v322
      %v728 = vmul.f32 %v722, %v321
      %v729 = vmul.f32 %v718, %v322
      %v730 = vmul.f32 %v723, %v321
      %v731 = vmul.f32 %v719, %v322
      %732 = vst [vmem:[#allocation2 + $0xc0] sm:$0xff] %v724
      %733 = vst [vmem:[#allocation2 + $0xc8] sm:$0xff] %v725
      %734 = vst [vmem:[#allocation2 + $0xd0] sm:$0xff] %v726
      %735 = vst [vmem:[#allocation2 + $0xd8] sm:$0xff] %v727
      %736 = vst [vmem:[#allocation2 + $0xe0] sm:$0xff] %v728
      %737 = vst [vmem:[#allocation2 + $0xe8] sm:$0xff] %v729
      %738 = vst [vmem:[#allocation2 + $0xf0] sm:$0xff] %v730
      %739 = vst [vmem:[#allocation2 + $0xf8] sm:$0xff] %v731
      %740 = vst [vmem:[#allocation2 + $0x100] sm:$0xff] %v572
      %741 = vst [vmem:[#allocation2 + $0x108] sm:$0xff] %v573
      %742 = vst [vmem:[#allocation2 + $0x110] sm:$0xff] %v574
      %743 = vst [vmem:[#allocation2 + $0x118] sm:$0xff] %v575
      %744 = vst [vmem:[#allocation2 + $0x120] sm:$0xff] %v576
      %745 = vst [vmem:[#allocation2 + $0x128] sm:$0xff] %v577
      %746 = vst [vmem:[#allocation2 + $0x130] sm:$0xff] %v578
      %747 = vst [vmem:[#allocation2 + $0x138] sm:$0xff] %v579
      %748 = vrot.lane.b32.xlu0 %v572, 127
      %v749 = vpop.permute.xlu0 %748
      %750 = vrot.lane.b32.xlu0 %v574, 127
      %v751 = vpop.permute.xlu0 %750
      %752 = vrot.lane.b32.xlu0 %v576, 127
      %v753 = vpop.permute.xlu0 %752
      %754 = vrot.lane.b32.xlu0 %v578, 127
      %v755 = vpop.permute.xlu0 %754
      %756 = vrot.lane.b32.xlu0 %v573, 127
      %v757 = vpop.permute.xlu0 %756
      %758 = vrot.lane.b32.xlu0 %v575, 127
      %v759 = vpop.permute.xlu0 %758
      %760 = vrot.lane.b32.xlu0 %v577, 127
      %v761 = vpop.permute.xlu0 %760
      %762 = vrot.lane.b32.xlu0 %v579, 127
      %v763 = vpop.permute.xlu0 %762
      %v764 = vsel %vm419, %v749, %v757
      %v765 = vsel %vm419, %v751, %v759
      %v766 = vsel %vm419, %v753, %v761
      %v767 = vsel %vm419, %v755, %v763
      %v768 = vsel %vm419, %v757, %v749
      %v769 = vsel %vm419, %v759, %v751
      %v770 = vsel %vm419, %v761, %v753
      %v771 = vsel %vm419, %v763, %v755
      %v772 = vmul.f32 %v764, %v329
      %v773 = vmul.f32 %v768, %v330
      %v774 = vmul.f32 %v765, %v329
      %v775 = vmul.f32 %v769, %v330
      %v776 = vmul.f32 %v766, %v329
      %v777 = vmul.f32 %v770, %v330
      %v778 = vmul.f32 %v767, %v329
      %v779 = vmul.f32 %v771, %v330
      %780 = vst [vmem:[#allocation2 + $0x140] sm:$0xff] %v772
      %781 = vst [vmem:[#allocation2 + $0x148] sm:$0xff] %v773
      %782 = vst [vmem:[#allocation2 + $0x150] sm:$0xff] %v774
      %783 = vst [vmem:[#allocation2 + $0x158] sm:$0xff] %v775
      %784 = vst [vmem:[#allocation2 + $0x160] sm:$0xff] %v776
      %785 = vst [vmem:[#allocation2 + $0x168] sm:$0xff] %v777
      %786 = vst [vmem:[#allocation2 + $0x170] sm:$0xff] %v778
      %787 = vst [vmem:[#allocation2 + $0x178] sm:$0xff] %v779
      %788 = vrot.lane.b32.xlu0 %v572, 113
      %v789 = vpop.permute.xlu0 %788
      %790 = vrot.lane.b32.xlu0 %v574, 113
      %v791 = vpop.permute.xlu0 %790
      %792 = vrot.lane.b32.xlu0 %v576, 113
      %v793 = vpop.permute.xlu0 %792
      %794 = vrot.lane.b32.xlu0 %v578, 113
      %v795 = vpop.permute.xlu0 %794
      %796 = vrot.lane.b32.xlu0 %v573, 113
      %v797 = vpop.permute.xlu0 %796
      %798 = vrot.lane.b32.xlu0 %v575, 113
      %v799 = vpop.permute.xlu0 %798
      %800 = vrot.lane.b32.xlu0 %v577, 113
      %v801 = vpop.permute.xlu0 %800
      %802 = vrot.lane.b32.xlu0 %v579, 113
      %v803 = vpop.permute.xlu0 %802
      %v804 = vsel %vm430, %v789, %v797
      %v805 = vsel %vm430, %v791, %v799
      %v806 = vsel %vm430, %v793, %v801
      %v807 = vsel %vm430, %v795, %v803
      %v808 = vsel %vm430, %v797, %v789
      %v809 = vsel %vm430, %v799, %v791
      %v810 = vsel %vm430, %v801, %v793
      %v811 = vsel %vm430, %v803, %v795
      %v812 = vmul.f32 %v804, %v345
      %v813 = vmul.f32 %v808, %v346
      %v814 = vmul.f32 %v805, %v345
      %v815 = vmul.f32 %v809, %v346
      %v816 = vmul.f32 %v806, %v345
      %v817 = vmul.f32 %v810, %v346
      %v818 = vmul.f32 %v807, %v345
      %v819 = vmul.f32 %v811, %v346
      %820 = vst [vmem:[#allocation2 + $0x180] sm:$0xff] %v812
      %821 = vst [vmem:[#allocation2 + $0x188] sm:$0xff] %v813
      %822 = vst [vmem:[#allocation2 + $0x190] sm:$0xff] %v814
      %823 = vst [vmem:[#allocation2 + $0x198] sm:$0xff] %v815
      %824 = vst [vmem:[#allocation2 + $0x1a0] sm:$0xff] %v816
      %825 = vst [vmem:[#allocation2 + $0x1a8] sm:$0xff] %v817
      %826 = vst [vmem:[#allocation2 + $0x1b0] sm:$0xff] %v818
      %827 = vst [vmem:[#allocation2 + $0x1b8] sm:$0xff] %v819
      %828 = vrot.lane.b32.xlu0 %v572, 112
      %v829 = vpop.permute.xlu0 %828
      %830 = vrot.lane.b32.xlu0 %v574, 112
      %v831 = vpop.permute.xlu0 %830
      %832 = vrot.lane.b32.xlu0 %v576, 112
      %v833 = vpop.permute.xlu0 %832
      %834 = vrot.lane.b32.xlu0 %v578, 112
      %v835 = vpop.permute.xlu0 %834
      %836 = vrot.lane.b32.xlu0 %v573, 112
      %v837 = vpop.permute.xlu0 %836
      %838 = vrot.lane.b32.xlu0 %v575, 112
      %v839 = vpop.permute.xlu0 %838
      %840 = vrot.lane.b32.xlu0 %v577, 112
      %v841 = vpop.permute.xlu0 %840
      %842 = vrot.lane.b32.xlu0 %v579, 112
      %v843 = vpop.permute.xlu0 %842
      %v844 = vsel %vm441, %v829, %v837
      %v845 = vsel %vm441, %v831, %v839
      %v846 = vsel %vm441, %v833, %v841
      %v847 = vsel %vm441, %v835, %v843
      %v848 = vsel %vm441, %v837, %v829
      %v849 = vsel %vm441, %v839, %v831
      %v850 = vsel %vm441, %v841, %v833
      %v851 = vsel %vm441, %v843, %v835
      %v852 = vmul.f32 %v844, %v353
      %v853 = vmul.f32 %v848, %v354
      %v854 = vmul.f32 %v845, %v353
      %v855 = vmul.f32 %v849, %v354
      %v856 = vmul.f32 %v846, %v353
      %v857 = vmul.f32 %v850, %v354
      %v858 = vmul.f32 %v847, %v353
      %v859 = vmul.f32 %v851, %v354
      %860 = vst [vmem:[#allocation2 + $0x1c0] sm:$0xff] %v852
      %861 = vst [vmem:[#allocation2 + $0x1c8] sm:$0xff] %v853
      %862 = vst [vmem:[#allocation2 + $0x1d0] sm:$0xff] %v854
      %863 = vst [vmem:[#allocation2 + $0x1d8] sm:$0xff] %v855
      %864 = vst [vmem:[#allocation2 + $0x1e0] sm:$0xff] %v856
      %865 = vst [vmem:[#allocation2 + $0x1e8] sm:$0xff] %v857
      %866 = vst [vmem:[#allocation2 + $0x1f0] sm:$0xff] %v858
      %867 = vst [vmem:[#allocation2 + $0x1f8] sm:$0xff] %v859
      %868 = vrot.lane.b32.xlu0 %v572, 111
      %v869 = vpop.permute.xlu0 %868
      %870 = vrot.lane.b32.xlu0 %v574, 111
      %v871 = vpop.permute.xlu0 %870
      %872 = vrot.lane.b32.xlu0 %v576, 111
      %v873 = vpop.permute.xlu0 %872
      %874 = vrot.lane.b32.xlu0 %v578, 111
      %v875 = vpop.permute.xlu0 %874
      %876 = vrot.lane.b32.xlu0 %v573, 111
      %v877 = vpop.permute.xlu0 %876
      %878 = vrot.lane.b32.xlu0 %v575, 111
      %v879 = vpop.permute.xlu0 %878
      %880 = vrot.lane.b32.xlu0 %v577, 111
      %v881 = vpop.permute.xlu0 %880
      %882 = vrot.lane.b32.xlu0 %v579, 111
      %v883 = vpop.permute.xlu0 %882
      %v884 = vsel %vm452, %v869, %v877
      %v885 = vsel %vm452, %v871, %v879
      %v886 = vsel %vm452, %v873, %v881
      %v887 = vsel %vm452, %v875, %v883
      %v888 = vsel %vm452, %v877, %v869
      %v889 = vsel %vm452, %v879, %v871
      %v890 = vsel %vm452, %v881, %v873
      %v891 = vsel %vm452, %v883, %v875
      %v892 = vmul.f32 %v884, %v361
      %v893 = vmul.f32 %v888, %v362
      %v894 = vmul.f32 %v885, %v361
      %v895 = vmul.f32 %v889, %v362
      %v896 = vmul.f32 %v886, %v361
      %v897 = vmul.f32 %v890, %v362
      %v898 = vmul.f32 %v887, %v361
      %v899 = vmul.f32 %v891, %v362
      %900 = vst [vmem:[#allocation2 + $0x200] sm:$0xff] %v892
      %901 = vst [vmem:[#allocation2 + $0x208] sm:$0xff] %v893
      %902 = vst [vmem:[#allocation2 + $0x210] sm:$0xff] %v894
      %903 = vst [vmem:[#allocation2 + $0x218] sm:$0xff] %v895
      %904 = vst [vmem:[#allocation2 + $0x220] sm:$0xff] %v896
      %905 = vst [vmem:[#allocation2 + $0x228] sm:$0xff] %v897
      %906 = vst [vmem:[#allocation2 + $0x230] sm:$0xff] %v898
      %907 = vst [vmem:[#allocation2 + $0x238] sm:$0xff] %v899
      %v908 = vld [vmem:[%s2] sm:$0xff]
      %v909 = vld [vmem:[%s2 + $0x8] sm:$0xff]
      %v910 = vld [vmem:[%s2 + $0x10] sm:$0xff]
      %v911 = vld [vmem:[%s2 + $0x18] sm:$0xff]
      %v912 = vld [vmem:[%s2 + $0x20] sm:$0xff]
      %v913 = vld [vmem:[%s2 + $0x28] sm:$0xff]
      %v914 = vld [vmem:[%s2 + $0x30] sm:$0xff]
      %v915 = vld [vmem:[%s2 + $0x38] sm:$0xff]
      %v916 = vld [vmem:[%s2 + $0x40] sm:$0xff]
      %v917 = vld [vmem:[%s2 + $0x48] sm:$0xff]
      %v918 = vld [vmem:[%s2 + $0x50] sm:$0xff]
      %v919 = vld [vmem:[%s2 + $0x58] sm:$0xff]
      %v920 = vld [vmem:[#allocation2] sm:$0xff]
      %v921 = vld [vmem:[#allocation2 + $0x8] sm:$0xff]
      %v922 = vld [vmem:[#allocation2 + $0x10] sm:$0xff]
      %v923 = vld [vmem:[#allocation2 + $0x18] sm:$0xff]
      %v924 = vld [vmem:[#allocation2 + $0x20] sm:$0xff]
      %v925 = vld [vmem:[#allocation2 + $0x28] sm:$0xff]
      %v926 = vld [vmem:[#allocation2 + $0x30] sm:$0xff]
      %v927 = vld [vmem:[#allocation2 + $0x38] sm:$0xff]
      %v928 = vld [vmem:[#allocation2 + $0x40] sm:$0xff]
      %v929 = vld [vmem:[#allocation2 + $0x48] sm:$0xff]
      %v930 = vld [vmem:[#allocation2 + $0x50] sm:$0xff]
      %v931 = vld [vmem:[#allocation2 + $0x58] sm:$0xff]
      %v932 = vld [vmem:[#allocation2 + $0x60] sm:$0xff]
      %v933 = vld [vmem:[#allocation2 + $0x68] sm:$0xff]
      %v934 = vld [vmem:[#allocation2 + $0x70] sm:$0xff]
      %v935 = vld [vmem:[#allocation2 + $0x78] sm:$0xff]
      %v936 = vld [vmem:[#allocation2 + $0x80] sm:$0xff]
      %v937 = vld [vmem:[#allocation2 + $0x88] sm:$0xff]
      %v938 = vld [vmem:[#allocation2 + $0x90] sm:$0xff]
      %v939 = vld [vmem:[#allocation2 + $0x98] sm:$0xff]
      %v940 = vld [vmem:[#allocation2 + $0xa0] sm:$0xff]
      %v941 = vld [vmem:[#allocation2 + $0xa8] sm:$0xff]
      %v942 = vld [vmem:[#allocation2 + $0xb0] sm:$0xff]
      %v943 = vld [vmem:[#allocation2 + $0xb8] sm:$0xff]
      %v944 = vld [vmem:[#allocation2 + $0xc0] sm:$0xff]
      %v945 = vld [vmem:[#allocation2 + $0xc8] sm:$0xff]
      %v946 = vld [vmem:[#allocation2 + $0xd0] sm:$0xff]
      %v947 = vld [vmem:[#allocation2 + $0xd8] sm:$0xff]
      %v948 = vld [vmem:[#allocation2 + $0xe0] sm:$0xff]
      %v949 = vld [vmem:[#allocation2 + $0xe8] sm:$0xff]
      %v950 = vld [vmem:[#allocation2 + $0xf0] sm:$0xff]
      %v951 = vld [vmem:[#allocation2 + $0xf8] sm:$0xff]
      %v952 = vld [vmem:[#allocation2 + $0x100] sm:$0xff]
      %v953 = vld [vmem:[#allocation2 + $0x108] sm:$0xff]
      %v954 = vld [vmem:[#allocation2 + $0x110] sm:$0xff]
      %v955 = vld [vmem:[#allocation2 + $0x118] sm:$0xff]
      %v956 = vld [vmem:[#allocation2 + $0x120] sm:$0xff]
      %v957 = vld [vmem:[#allocation2 + $0x128] sm:$0xff]
      %v958 = vld [vmem:[#allocation2 + $0x130] sm:$0xff]
      %v959 = vld [vmem:[#allocation2 + $0x138] sm:$0xff]
      %v960 = vld [vmem:[#allocation2 + $0x140] sm:$0xff]
      %v961 = vld [vmem:[#allocation2 + $0x148] sm:$0xff]
      %v962 = vld [vmem:[#allocation2 + $0x150] sm:$0xff]
      %v963 = vld [vmem:[#allocation2 + $0x158] sm:$0xff]
      %v964 = vld [vmem:[#allocation2 + $0x160] sm:$0xff]
      %v965 = vld [vmem:[#allocation2 + $0x168] sm:$0xff]
      %v966 = vld [vmem:[#allocation2 + $0x170] sm:$0xff]
      %v967 = vld [vmem:[#allocation2 + $0x178] sm:$0xff]
      %v968 = vld [vmem:[#allocation2 + $0x180] sm:$0xff]
      %v969 = vld [vmem:[#allocation2 + $0x188] sm:$0xff]
      %v970 = vld [vmem:[#allocation2 + $0x190] sm:$0xff]
      %v971 = vld [vmem:[#allocation2 + $0x198] sm:$0xff]
      %v972 = vld [vmem:[#allocation2 + $0x1a0] sm:$0xff]
      %v973 = vld [vmem:[#allocation2 + $0x1a8] sm:$0xff]
      %v974 = vld [vmem:[#allocation2 + $0x1b0] sm:$0xff]
      %v975 = vld [vmem:[#allocation2 + $0x1b8] sm:$0xff]
      %v976 = vld [vmem:[#allocation2 + $0x1c0] sm:$0xff]
      %v977 = vld [vmem:[#allocation2 + $0x1c8] sm:$0xff]
      %v978 = vld [vmem:[#allocation2 + $0x1d0] sm:$0xff]
      %v979 = vld [vmem:[#allocation2 + $0x1d8] sm:$0xff]
      %v980 = vld [vmem:[#allocation2 + $0x1e0] sm:$0xff]
      %v981 = vld [vmem:[#allocation2 + $0x1e8] sm:$0xff]
      %v982 = vld [vmem:[#allocation2 + $0x1f0] sm:$0xff]
      %v983 = vld [vmem:[#allocation2 + $0x1f8] sm:$0xff]
      %v984 = vld [vmem:[#allocation2 + $0x200] sm:$0xff]
      %v985 = vld [vmem:[#allocation2 + $0x208] sm:$0xff]
      %v986 = vld [vmem:[#allocation2 + $0x210] sm:$0xff]
      %v987 = vld [vmem:[#allocation2 + $0x218] sm:$0xff]
      %v988 = vld [vmem:[#allocation2 + $0x220] sm:$0xff]
      %v989 = vld [vmem:[#allocation2 + $0x228] sm:$0xff]
      %v990 = vld [vmem:[#allocation2 + $0x230] sm:$0xff]
      %v991 = vld [vmem:[#allocation2 + $0x238] sm:$0xff]
      %992 = vset.pattern.permute.xlu0 1
      %993 = vperm.xlu0 %992, %v365
      %v994 = vpop.permute.xlu0 %993
      %996 = vset.pattern.permute.xlu0 1
      %997 = vperm.xlu0 %996, %v366
      %v998 = vpop.permute.xlu0 %997
      %1000 = vset.pattern.permute.xlu0 1
      %1001 = vperm.xlu0 %1000, %v367
      %v1002 = vpop.permute.xlu0 %1001
      %1004 = vset.pattern.permute.xlu0 1
      %1005 = vperm.xlu0 %1004, %v368
      %v1006 = vpop.permute.xlu0 %1005
      %vm1008 = vcmask 261120
      %v1010 = vsel %vm1008, %v910, 0
      %v1013 = vsel %vm1008, %v913, 0
      %v1016 = vsel %vm1008, %v916, 0
      %v1019 = vsel %vm1008, %v919, 0
      %1021 = vmatpush.msra.mxu0 %v950
      %1022 = vmatpush.msra.mxu0 %v948
      %1023 = vmatpush.msra.mxu0 %v946
      %1024 = vmatpush.msra.mxu0 %v944
      %1025 = vmatpush.msra.mxu0 %v942
      %1026 = vmatpush.msra.mxu0 %v940
      %1027 = vmatpush.msra.mxu0 %v938
      %1028 = vmatpush.msra.mxu0 %v936
      %1029 = vmatpush.msra.mxu0 %v934
      %1030 = vmatpush.msra.mxu0 %v932
      %1031 = vmatpush.msra.mxu0 %v930
      %1032 = vmatpush.msra.mxu0 %v928
      %1033 = vmatpush.msra.mxu0 %v926
      %1034 = vmatpush.msra.mxu0 %v924
      %1035 = vmatpush.msra.mxu0 %v922
      %1036 = vmatpush.msra.mxu0 %v920
      %1037 = vmatmul.f32.gmra.mxu0 %v908
      %v1038 = vpop.f32.mrf.mxu0
      %v1039 = vadd.f32 %v994, %v1038
      %1040 = vmatmul.f32.gmra.mxu0 %v911
      %v1041 = vpop.f32.mrf.mxu0
      %v1042 = vadd.f32 %v998, %v1041
      %1043 = vmatmul.f32.gmra.mxu0 %v914
      %v1044 = vpop.f32.mrf.mxu0
      %v1045 = vadd.f32 %v1002, %v1044
      %1046 = vmatmul.f32.gmra.mxu0 %v917
      %v1047 = vpop.f32.mrf.mxu0
      %v1048 = vadd.f32 %v1006, %v1047
      %1049 = vdwg.mxu0
      %1050 = vmatpush.msra.mxu0 %v982
      %1051 = vmatpush.msra.mxu0 %v980
      %1052 = vmatpush.msra.mxu0 %v978
      %1053 = vmatpush.msra.mxu0 %v976
      %1054 = vmatpush.msra.mxu0 %v974
      %1055 = vmatpush.msra.mxu0 %v972
      %1056 = vmatpush.msra.mxu0 %v970
      %1057 = vmatpush.msra.mxu0 %v968
      %1058 = vmatpush.msra.mxu0 %v966
      %1059 = vmatpush.msra.mxu0 %v964
      %1060 = vmatpush.msra.mxu0 %v962
      %1061 = vmatpush.msra.mxu0 %v960
      %1062 = vmatpush.msra.mxu0 %v958
      %1063 = vmatpush.msra.mxu0 %v956
      %1064 = vmatpush.msra.mxu0 %v954
      %1065 = vmatpush.msra.mxu0 %v952
      %1066 = vmatmul.f32.gmra.mxu0 %v909
      %v1067 = vpop.f32.mrf.mxu0
      %v1068 = vadd.f32 %v1039, %v1067
      %1069 = vmatmul.f32.gmra.mxu0 %v912
      %v1070 = vpop.f32.mrf.mxu0
      %v1071 = vadd.f32 %v1042, %v1070
      %1072 = vmatmul.f32.gmra.mxu0 %v915
      %v1073 = vpop.f32.mrf.mxu0
      %v1074 = vadd.f32 %v1045, %v1073
      %1075 = vmatmul.f32.gmra.mxu0 %v918
      %v1076 = vpop.f32.mrf.mxu0
      %v1077 = vadd.f32 %v1048, %v1076
      %1078 = vdwg.mxu0
      %1079 = vmatpush.msra.mxu0 0.0
      %1080 = vmatpush.msra.mxu0 0.0
      %1081 = vmatpush.msra.mxu0 0.0
      %1082 = vmatpush.msra.mxu0 0.0
      %1083 = vmatpush.msra.mxu0 0.0
      %1084 = vmatpush.msra.mxu0 0.0
      %1085 = vmatpush.msra.mxu0 0.0
      %1086 = vmatpush.msra.mxu0 0.0
      %1087 = vmatpush.msra.mxu0 0.0
      %1088 = vmatpush.msra.mxu0 0.0
      %1089 = vmatpush.msra.mxu0 0.0
      %1090 = vmatpush.msra.mxu0 0.0
      %1091 = vmatpush.msra.mxu0 %v990
      %1092 = vmatpush.msra.mxu0 %v988
      %1093 = vmatpush.msra.mxu0 %v986
      %1094 = vmatpush.msra.mxu0 %v984
      %1095 = vmatmul.f32.gmra.mxu0 %v1010
      %v1096 = vpop.f32.mrf.mxu0
      %v1097 = vadd.f32 %v1068, %v1096
      %1098 = vmatmul.f32.gmra.mxu0 %v1013
      %v1099 = vpop.f32.mrf.mxu0
      %v1100 = vadd.f32 %v1071, %v1099
      %1101 = vmatmul.f32.gmra.mxu0 %v1016
      %v1102 = vpop.f32.mrf.mxu0
      %v1103 = vadd.f32 %v1074, %v1102
      %1104 = vmatmul.f32.gmra.mxu0 %v1019
      %v1105 = vpop.f32.mrf.mxu0
      %v1106 = vadd.f32 %v1077, %v1105
      %1107 = vdwg.mxu0
      %1108 = vmatpush.msra.mxu0 %v951
      %1109 = vmatpush.msra.mxu0 %v949
      %1110 = vmatpush.msra.mxu0 %v947
      %1111 = vmatpush.msra.mxu0 %v945
      %1112 = vmatpush.msra.mxu0 %v943
      %1113 = vmatpush.msra.mxu0 %v941
      %1114 = vmatpush.msra.mxu0 %v939
      %1115 = vmatpush.msra.mxu0 %v937
      %1116 = vmatpush.msra.mxu0 %v935
      %1117 = vmatpush.msra.mxu0 %v933
      %1118 = vmatpush.msra.mxu0 %v931
      %1119 = vmatpush.msra.mxu0 %v929
      %1120 = vmatpush.msra.mxu0 %v927
      %1121 = vmatpush.msra.mxu0 %v925
      %1122 = vmatpush.msra.mxu0 %v923
      %1123 = vmatpush.msra.mxu0 %v921
      %1124 = vmatmul.f32.gmra.mxu0 %v908
      %v1125 = vpop.f32.mrf.mxu0
      %v1126 = vadd.f32 %v994, %v1125
      %1127 = vmatmul.f32.gmra.mxu0 %v911
      %v1128 = vpop.f32.mrf.mxu0
      %v1129 = vadd.f32 %v998, %v1128
      %1130 = vmatmul.f32.gmra.mxu0 %v914
      %v1131 = vpop.f32.mrf.mxu0
      %v1132 = vadd.f32 %v1002, %v1131
      %1133 = vmatmul.f32.gmra.mxu0 %v917
      %v1134 = vpop.f32.mrf.mxu0
      %v1135 = vadd.f32 %v1006, %v1134
      %1136 = vdwg.mxu0
      %1137 = vmatpush.msra.mxu0 %v983
      %1138 = vmatpush.msra.mxu0 %v981
      %1139 = vmatpush.msra.mxu0 %v979
      %1140 = vmatpush.msra.mxu0 %v977
      %1141 = vmatpush.msra.mxu0 %v975
      %1142 = vmatpush.msra.mxu0 %v973
      %1143 = vmatpush.msra.mxu0 %v971
      %1144 = vmatpush.msra.mxu0 %v969
      %1145 = vmatpush.msra.mxu0 %v967
      %1146 = vmatpush.msra.mxu0 %v965
      %1147 = vmatpush.msra.mxu0 %v963
      %1148 = vmatpush.msra.mxu0 %v961
      %1149 = vmatpush.msra.mxu0 %v959
      %1150 = vmatpush.msra.mxu0 %v957
      %1151 = vmatpush.msra.mxu0 %v955
      %1152 = vmatpush.msra.mxu0 %v953
      %1153 = vmatmul.f32.gmra.mxu0 %v909
      %v1154 = vpop.f32.mrf.mxu0
      %v1155 = vadd.f32 %v1126, %v1154
      %1156 = vmatmul.f32.gmra.mxu0 %v912
      %v1157 = vpop.f32.mrf.mxu0
      %v1158 = vadd.f32 %v1129, %v1157
      %1159 = vmatmul.f32.gmra.mxu0 %v915
      %v1160 = vpop.f32.mrf.mxu0
      %v1161 = vadd.f32 %v1132, %v1160
      %1162 = vmatmul.f32.gmra.mxu0 %v918
      %v1163 = vpop.f32.mrf.mxu0
      %v1164 = vadd.f32 %v1135, %v1163
      %1165 = vdwg.mxu0
      %1166 = vmatpush.msra.mxu0 0.0
      %1167 = vmatpush.msra.mxu0 0.0
      %1168 = vmatpush.msra.mxu0 0.0
      %1169 = vmatpush.msra.mxu0 0.0
      %1170 = vmatpush.msra.mxu0 0.0
      %1171 = vmatpush.msra.mxu0 0.0
      %1172 = vmatpush.msra.mxu0 0.0
      %1173 = vmatpush.msra.mxu0 0.0
      %1174 = vmatpush.msra.mxu0 0.0
      %1175 = vmatpush.msra.mxu0 0.0
      %1176 = vmatpush.msra.mxu0 0.0
      %1177 = vmatpush.msra.mxu0 0.0
      %1178 = vmatpush.msra.mxu0 %v991
      %1179 = vmatpush.msra.mxu0 %v989
      %1180 = vmatpush.msra.mxu0 %v987
      %1181 = vmatpush.msra.mxu0 %v985
      %1182 = vmatmul.f32.gmra.mxu0 %v1010
      %v1183 = vpop.f32.mrf.mxu0
      %v1184 = vadd.f32 %v1155, %v1183
      %1185 = vmatmul.f32.gmra.mxu0 %v1013
      %v1186 = vpop.f32.mrf.mxu0
      %v1187 = vadd.f32 %v1158, %v1186
      %1188 = vmatmul.f32.gmra.mxu0 %v1016
      %v1189 = vpop.f32.mrf.mxu0
      %v1190 = vadd.f32 %v1161, %v1189
      %1191 = vmatmul.f32.gmra.mxu0 %v1019
      %v1192 = vpop.f32.mrf.mxu0
      %v1193 = vadd.f32 %v1164, %v1192
      %1194 = vdwg.mxu0
      %v1195 = vmax.f32 %v1097, 0.0
      %v1196 = vmax.f32 %v1184, 0.0
      %v1197 = vmax.f32 %v1100, 0.0
      %v1198 = vmax.f32 %v1187, 0.0
      %v1199 = vmax.f32 %v1103, 0.0
      %v1200 = vmax.f32 %v1190, 0.0
      %v1201 = vmax.f32 %v1106, 0.0
      %v1202 = vmax.f32 %v1193, 0.0
      %1203 = vrot.lane.b32.xlu0 %v1195, 17
      %v1204 = vpop.permute.xlu0 %1203
      %1205 = vrot.lane.b32.xlu0 %v1197, 17
      %v1206 = vpop.permute.xlu0 %1205
      %1207 = vrot.lane.b32.xlu0 %v1199, 17
      %v1208 = vpop.permute.xlu0 %1207
      %1209 = vrot.lane.b32.xlu0 %v1201, 17
      %v1210 = vpop.permute.xlu0 %1209
      %1211 = vrot.lane.b32.xlu0 %v1196, 17
      %v1212 = vpop.permute.xlu0 %1211
      %1213 = vrot.lane.b32.xlu0 %v1198, 17
      %v1214 = vpop.permute.xlu0 %1213
      %1215 = vrot.lane.b32.xlu0 %v1200, 17
      %v1216 = vpop.permute.xlu0 %1215
      %1217 = vrot.lane.b32.xlu0 %v1202, 17
      %v1218 = vpop.permute.xlu0 %1217
      %v1219 = vsel %vm373, %v1204, %v1212
      %v1220 = vsel %vm373, %v1206, %v1214
      %v1221 = vsel %vm373, %v1208, %v1216
      %v1222 = vsel %vm373, %v1210, %v1218
      %v1223 = vsel %vm373, %v1212, %v1204
      %v1224 = vsel %vm373, %v1214, %v1206
      %v1225 = vsel %vm373, %v1216, %v1208
      %v1226 = vsel %vm373, %v1218, %v1210
      %v1227 = vmul.f32 %v1223, %v281
      %v1228 = vmul.f32 %v1219, %v282
      %v1229 = vmul.f32 %v1224, %v281
      %v1230 = vmul.f32 %v1220, %v282
      %v1231 = vmul.f32 %v1225, %v281
      %v1232 = vmul.f32 %v1221, %v282
      %v1233 = vmul.f32 %v1226, %v281
      %v1234 = vmul.f32 %v1222, %v282
      %v1235 = vld [vmem:[%s3] sm:$0xff]
      %v1236 = vld [vmem:[%s3 + $0x8] sm:$0xff]
      %v1237 = vld [vmem:[%s3 + $0x10] sm:$0xff]
      %v1238 = vld [vmem:[%s3 + $0x18] sm:$0xff]
      %1240 = vset.pattern.permute.xlu0 0
      %1241 = vperm.xlu0 %1240, %v1235
      %v1242 = vpop.permute.xlu0 %1241
      %1245 = vset.pattern.permute.xlu0 0
      %1246 = vperm.xlu0 %1245, %v1236
      %v1247 = vpop.permute.xlu0 %1246
      %1250 = vset.pattern.permute.xlu0 0
      %1251 = vperm.xlu0 %1250, %v1237
      %v1252 = vpop.permute.xlu0 %1251
      %1255 = vset.pattern.permute.xlu0 0
      %1256 = vperm.xlu0 %1255, %v1238
      %v1257 = vpop.permute.xlu0 %1256
      %v1259 = vmul.f32 %v1227, %v1242
      %v1260 = vmul.f32 %v1228, %v1242
      %v1261 = vmul.f32 %v1229, %v1247
      %v1262 = vmul.f32 %v1230, %v1247
      %v1263 = vmul.f32 %v1231, %v1252
      %v1264 = vmul.f32 %v1232, %v1252
      %v1265 = vmul.f32 %v1233, %v1257
      %v1266 = vmul.f32 %v1234, %v1257
      %v1267 = vadd.f32 %v1259, 0.0
      %v1268 = vadd.f32 %v1260, 0.0
      %v1269 = vadd.f32 %v1261, 0.0
      %v1270 = vadd.f32 %v1262, 0.0
      %v1271 = vadd.f32 %v1263, 0.0
      %v1272 = vadd.f32 %v1264, 0.0
      %v1273 = vadd.f32 %v1265, 0.0
      %v1274 = vadd.f32 %v1266, 0.0
      %1275 = vrot.lane.b32.xlu0 %v1195, 16
      %v1276 = vpop.permute.xlu0 %1275
      %1277 = vrot.lane.b32.xlu0 %v1197, 16
      %v1278 = vpop.permute.xlu0 %1277
      %1279 = vrot.lane.b32.xlu0 %v1199, 16
      %v1280 = vpop.permute.xlu0 %1279
      %1281 = vrot.lane.b32.xlu0 %v1201, 16
      %v1282 = vpop.permute.xlu0 %1281
      %1283 = vrot.lane.b32.xlu0 %v1196, 16
      %v1284 = vpop.permute.xlu0 %1283
      %1285 = vrot.lane.b32.xlu0 %v1198, 16
      %v1286 = vpop.permute.xlu0 %1285
      %1287 = vrot.lane.b32.xlu0 %v1200, 16
      %v1288 = vpop.permute.xlu0 %1287
      %1289 = vrot.lane.b32.xlu0 %v1202, 16
      %v1290 = vpop.permute.xlu0 %1289
      %v1291 = vsel %vm384, %v1276, %v1284
      %v1292 = vsel %vm384, %v1278, %v1286
      %v1293 = vsel %vm384, %v1280, %v1288
      %v1294 = vsel %vm384, %v1282, %v1290
      %v1295 = vsel %vm384, %v1284, %v1276
      %v1296 = vsel %vm384, %v1286, %v1278
      %v1297 = vsel %vm384, %v1288, %v1280
      %v1298 = vsel %vm384, %v1290, %v1282
      %v1299 = vmul.f32 %v1295, %v293
      %v1300 = vmul.f32 %v1291, %v294
      %v1301 = vmul.f32 %v1296, %v293
      %v1302 = vmul.f32 %v1292, %v294
      %v1303 = vmul.f32 %v1297, %v293
      %v1304 = vmul.f32 %v1293, %v294
      %v1305 = vmul.f32 %v1298, %v293
      %v1306 = vmul.f32 %v1294, %v294
      %v1307 = vld [vmem:[%s3 + $0x20] sm:$0xff]
      %v1308 = vld [vmem:[%s3 + $0x28] sm:$0xff]
      %v1309 = vld [vmem:[%s3 + $0x30] sm:$0xff]
      %v1310 = vld [vmem:[%s3 + $0x38] sm:$0xff]
      %1312 = vset.pattern.permute.xlu0 0
      %1313 = vperm.xlu0 %1312, %v1307
      %v1314 = vpop.permute.xlu0 %1313
      %1317 = vset.pattern.permute.xlu0 0
      %1318 = vperm.xlu0 %1317, %v1308
      %v1319 = vpop.permute.xlu0 %1318
      %1322 = vset.pattern.permute.xlu0 0
      %1323 = vperm.xlu0 %1322, %v1309
      %v1324 = vpop.permute.xlu0 %1323
      %1327 = vset.pattern.permute.xlu0 0
      %1328 = vperm.xlu0 %1327, %v1310
      %v1329 = vpop.permute.xlu0 %1328
      %v1331 = vmul.f32 %v1299, %v1314
      %v1332 = vmul.f32 %v1300, %v1314
      %v1333 = vmul.f32 %v1301, %v1319
      %v1334 = vmul.f32 %v1302, %v1319
      %v1335 = vmul.f32 %v1303, %v1324
      %v1336 = vmul.f32 %v1304, %v1324
      %v1337 = vmul.f32 %v1305, %v1329
      %v1338 = vmul.f32 %v1306, %v1329
      %v1339 = vadd.f32 %v1267, %v1331
      %v1340 = vadd.f32 %v1268, %v1332
      %v1341 = vadd.f32 %v1269, %v1333
      %v1342 = vadd.f32 %v1270, %v1334
      %v1343 = vadd.f32 %v1271, %v1335
      %v1344 = vadd.f32 %v1272, %v1336
      %v1345 = vadd.f32 %v1273, %v1337
      %v1346 = vadd.f32 %v1274, %v1338
      %1347 = vrot.lane.b32.xlu0 %v1195, 15
      %v1348 = vpop.permute.xlu0 %1347
      %1349 = vrot.lane.b32.xlu0 %v1197, 15
      %v1350 = vpop.permute.xlu0 %1349
      %1351 = vrot.lane.b32.xlu0 %v1199, 15
      %v1352 = vpop.permute.xlu0 %1351
      %1353 = vrot.lane.b32.xlu0 %v1201, 15
      %v1354 = vpop.permute.xlu0 %1353
      %1355 = vrot.lane.b32.xlu0 %v1196, 15
      %v1356 = vpop.permute.xlu0 %1355
      %1357 = vrot.lane.b32.xlu0 %v1198, 15
      %v1358 = vpop.permute.xlu0 %1357
      %1359 = vrot.lane.b32.xlu0 %v1200, 15
      %v1360 = vpop.permute.xlu0 %1359
      %1361 = vrot.lane.b32.xlu0 %v1202, 15
      %v1362 = vpop.permute.xlu0 %1361
      %v1363 = vsel %vm395, %v1348, %v1356
      %v1364 = vsel %vm395, %v1350, %v1358
      %v1365 = vsel %vm395, %v1352, %v1360
      %v1366 = vsel %vm395, %v1354, %v1362
      %v1367 = vsel %vm395, %v1356, %v1348
      %v1368 = vsel %vm395, %v1358, %v1350
      %v1369 = vsel %vm395, %v1360, %v1352
      %v1370 = vsel %vm395, %v1362, %v1354
      %v1371 = vmul.f32 %v1367, %v307
      %v1372 = vmul.f32 %v1363, %v308
      %v1373 = vmul.f32 %v1368, %v307
      %v1374 = vmul.f32 %v1364, %v308
      %v1375 = vmul.f32 %v1369, %v307
      %v1376 = vmul.f32 %v1365, %v308
      %v1377 = vmul.f32 %v1370, %v307
      %v1378 = vmul.f32 %v1366, %v308
      %v1379 = vld [vmem:[%s3 + $0x40] sm:$0xff]
      %v1380 = vld [vmem:[%s3 + $0x48] sm:$0xff]
      %v1381 = vld [vmem:[%s3 + $0x50] sm:$0xff]
      %v1382 = vld [vmem:[%s3 + $0x58] sm:$0xff]
      %1384 = vset.pattern.permute.xlu0 0
      %1385 = vperm.xlu0 %1384, %v1379
      %v1386 = vpop.permute.xlu0 %1385
      %1389 = vset.pattern.permute.xlu0 0
      %1390 = vperm.xlu0 %1389, %v1380
      %v1391 = vpop.permute.xlu0 %1390
      %1394 = vset.pattern.permute.xlu0 0
      %1395 = vperm.xlu0 %1394, %v1381
      %v1396 = vpop.permute.xlu0 %1395
      %1399 = vset.pattern.permute.xlu0 0
      %1400 = vperm.xlu0 %1399, %v1382
      %v1401 = vpop.permute.xlu0 %1400
      %v1403 = vmul.f32 %v1371, %v1386
      %v1404 = vmul.f32 %v1372, %v1386
      %v1405 = vmul.f32 %v1373, %v1391
      %v1406 = vmul.f32 %v1374, %v1391
      %v1407 = vmul.f32 %v1375, %v1396
      %v1408 = vmul.f32 %v1376, %v1396
      %v1409 = vmul.f32 %v1377, %v1401
      %v1410 = vmul.f32 %v1378, %v1401
      %v1411 = vadd.f32 %v1339, %v1403
      %v1412 = vadd.f32 %v1340, %v1404
      %v1413 = vadd.f32 %v1341, %v1405
      %v1414 = vadd.f32 %v1342, %v1406
      %v1415 = vadd.f32 %v1343, %v1407
      %v1416 = vadd.f32 %v1344, %v1408
      %v1417 = vadd.f32 %v1345, %v1409
      %v1418 = vadd.f32 %v1346, %v1410
      %1419 = vrot.lane.b32.xlu0 %v1195, 1
      %v1420 = vpop.permute.xlu0 %1419
      %1421 = vrot.lane.b32.xlu0 %v1197, 1
      %v1422 = vpop.permute.xlu0 %1421
      %1423 = vrot.lane.b32.xlu0 %v1199, 1
      %v1424 = vpop.permute.xlu0 %1423
      %1425 = vrot.lane.b32.xlu0 %v1201, 1
      %v1426 = vpop.permute.xlu0 %1425
      %1427 = vrot.lane.b32.xlu0 %v1196, 1
      %v1428 = vpop.permute.xlu0 %1427
      %1429 = vrot.lane.b32.xlu0 %v1198, 1
      %v1430 = vpop.permute.xlu0 %1429
      %1431 = vrot.lane.b32.xlu0 %v1200, 1
      %v1432 = vpop.permute.xlu0 %1431
      %1433 = vrot.lane.b32.xlu0 %v1202, 1
      %v1434 = vpop.permute.xlu0 %1433
      %v1435 = vsel %vm406, %v1420, %v1428
      %v1436 = vsel %vm406, %v1422, %v1430
      %v1437 = vsel %vm406, %v1424, %v1432
      %v1438 = vsel %vm406, %v1426, %v1434
      %v1439 = vsel %vm406, %v1428, %v1420
      %v1440 = vsel %vm406, %v1430, %v1422
      %v1441 = vsel %vm406, %v1432, %v1424
      %v1442 = vsel %vm406, %v1434, %v1426
      %v1443 = vmul.f32 %v1439, %v321
      %v1444 = vmul.f32 %v1435, %v322
      %v1445 = vmul.f32 %v1440, %v321
      %v1446 = vmul.f32 %v1436, %v322
      %v1447 = vmul.f32 %v1441, %v321
      %v1448 = vmul.f32 %v1437, %v322
      %v1449 = vmul.f32 %v1442, %v321
      %v1450 = vmul.f32 %v1438, %v322
      %v1451 = vld [vmem:[%s3 + $0x60] sm:$0xff]
      %v1452 = vld [vmem:[%s3 + $0x68] sm:$0xff]
      %v1453 = vld [vmem:[%s3 + $0x70] sm:$0xff]
      %v1454 = vld [vmem:[%s3 + $0x78] sm:$0xff]
      %1456 = vset.pattern.permute.xlu0 0
      %1457 = vperm.xlu0 %1456, %v1451
      %v1458 = vpop.permute.xlu0 %1457
      %1461 = vset.pattern.permute.xlu0 0
      %1462 = vperm.xlu0 %1461, %v1452
      %v1463 = vpop.permute.xlu0 %1462
      %1466 = vset.pattern.permute.xlu0 0
      %1467 = vperm.xlu0 %1466, %v1453
      %v1468 = vpop.permute.xlu0 %1467
      %1471 = vset.pattern.permute.xlu0 0
      %1472 = vperm.xlu0 %1471, %v1454
      %v1473 = vpop.permute.xlu0 %1472
      %v1475 = vmul.f32 %v1443, %v1458
      %v1476 = vmul.f32 %v1444, %v1458
      %v1477 = vmul.f32 %v1445, %v1463
      %v1478 = vmul.f32 %v1446, %v1463
      %v1479 = vmul.f32 %v1447, %v1468
      %v1480 = vmul.f32 %v1448, %v1468
      %v1481 = vmul.f32 %v1449, %v1473
      %v1482 = vmul.f32 %v1450, %v1473
      %v1483 = vadd.f32 %v1411, %v1475
      %v1484 = vadd.f32 %v1412, %v1476
      %v1485 = vadd.f32 %v1413, %v1477
      %v1486 = vadd.f32 %v1414, %v1478
      %v1487 = vadd.f32 %v1415, %v1479
      %v1488 = vadd.f32 %v1416, %v1480
      %v1489 = vadd.f32 %v1417, %v1481
      %v1490 = vadd.f32 %v1418, %v1482
      %v1491 = vld [vmem:[%s3 + $0x80] sm:$0xff]
      %v1492 = vld [vmem:[%s3 + $0x88] sm:$0xff]
      %v1493 = vld [vmem:[%s3 + $0x90] sm:$0xff]
      %v1494 = vld [vmem:[%s3 + $0x98] sm:$0xff]
      %1496 = vset.pattern.permute.xlu0 0
      %1497 = vperm.xlu0 %1496, %v1491
      %v1498 = vpop.permute.xlu0 %1497
      %1501 = vset.pattern.permute.xlu0 0
      %1502 = vperm.xlu0 %1501, %v1492
      %v1503 = vpop.permute.xlu0 %1502
      %1506 = vset.pattern.permute.xlu0 0
      %1507 = vperm.xlu0 %1506, %v1493
      %v1508 = vpop.permute.xlu0 %1507
      %1511 = vset.pattern.permute.xlu0 0
      %1512 = vperm.xlu0 %1511, %v1494
      %v1513 = vpop.permute.xlu0 %1512
      %v1515 = vmul.f32 %v1195, %v1498
      %v1516 = vmul.f32 %v1196, %v1498
      %v1517 = vmul.f32 %v1197, %v1503
      %v1518 = vmul.f32 %v1198, %v1503
      %v1519 = vmul.f32 %v1199, %v1508
      %v1520 = vmul.f32 %v1200, %v1508
      %v1521 = vmul.f32 %v1201, %v1513
      %v1522 = vmul.f32 %v1202, %v1513
      %v1523 = vadd.f32 %v1483, %v1515
      %v1524 = vadd.f32 %v1484, %v1516
      %v1525 = vadd.f32 %v1485, %v1517
      %v1526 = vadd.f32 %v1486, %v1518
      %v1527 = vadd.f32 %v1487, %v1519
      %v1528 = vadd.f32 %v1488, %v1520
      %v1529 = vadd.f32 %v1489, %v1521
      %v1530 = vadd.f32 %v1490, %v1522
      %1531 = vrot.lane.b32.xlu0 %v1195, 127
      %v1532 = vpop.permute.xlu0 %1531
      %1533 = vrot.lane.b32.xlu0 %v1197, 127
      %v1534 = vpop.permute.xlu0 %1533
      %1535 = vrot.lane.b32.xlu0 %v1199, 127
      %v1536 = vpop.permute.xlu0 %1535
      %1537 = vrot.lane.b32.xlu0 %v1201, 127
      %v1538 = vpop.permute.xlu0 %1537
      %1539 = vrot.lane.b32.xlu0 %v1196, 127
      %v1540 = vpop.permute.xlu0 %1539
      %1541 = vrot.lane.b32.xlu0 %v1198, 127
      %v1542 = vpop.permute.xlu0 %1541
      %1543 = vrot.lane.b32.xlu0 %v1200, 127
      %v1544 = vpop.permute.xlu0 %1543
      %1545 = vrot.lane.b32.xlu0 %v1202, 127
      %v1546 = vpop.permute.xlu0 %1545
      %v1547 = vsel %vm419, %v1532, %v1540
      %v1548 = vsel %vm419, %v1534, %v1542
      %v1549 = vsel %vm419, %v1536, %v1544
      %v1550 = vsel %vm419, %v1538, %v1546
      %v1551 = vsel %vm419, %v1540, %v1532
      %v1552 = vsel %vm419, %v1542, %v1534
      %v1553 = vsel %vm419, %v1544, %v1536
      %v1554 = vsel %vm419, %v1546, %v1538
      %v1555 = vmul.f32 %v1547, %v329
      %v1556 = vmul.f32 %v1551, %v330
      %v1557 = vmul.f32 %v1548, %v329
      %v1558 = vmul.f32 %v1552, %v330
      %v1559 = vmul.f32 %v1549, %v329
      %v1560 = vmul.f32 %v1553, %v330
      %v1561 = vmul.f32 %v1550, %v329
      %v1562 = vmul.f32 %v1554, %v330
      %v1563 = vld [vmem:[%s3 + $0xa0] sm:$0xff]
      %v1564 = vld [vmem:[%s3 + $0xa8] sm:$0xff]
      %v1565 = vld [vmem:[%s3 + $0xb0] sm:$0xff]
      %v1566 = vld [vmem:[%s3 + $0xb8] sm:$0xff]
      %1568 = vset.pattern.permute.xlu0 0
      %1569 = vperm.xlu0 %1568, %v1563
      %v1570 = vpop.permute.xlu0 %1569
      %1573 = vset.pattern.permute.xlu0 0
      %1574 = vperm.xlu0 %1573, %v1564
      %v1575 = vpop.permute.xlu0 %1574
      %1578 = vset.pattern.permute.xlu0 0
      %1579 = vperm.xlu0 %1578, %v1565
      %v1580 = vpop.permute.xlu0 %1579
      %1583 = vset.pattern.permute.xlu0 0
      %1584 = vperm.xlu0 %1583, %v1566
      %v1585 = vpop.permute.xlu0 %1584
      %v1587 = vmul.f32 %v1555, %v1570
      %v1588 = vmul.f32 %v1556, %v1570
      %v1589 = vmul.f32 %v1557, %v1575
      %v1590 = vmul.f32 %v1558, %v1575
      %v1591 = vmul.f32 %v1559, %v1580
      %v1592 = vmul.f32 %v1560, %v1580
      %v1593 = vmul.f32 %v1561, %v1585
      %v1594 = vmul.f32 %v1562, %v1585
      %v1595 = vadd.f32 %v1523, %v1587
      %v1596 = vadd.f32 %v1524, %v1588
      %v1597 = vadd.f32 %v1525, %v1589
      %v1598 = vadd.f32 %v1526, %v1590
      %v1599 = vadd.f32 %v1527, %v1591
      %v1600 = vadd.f32 %v1528, %v1592
      %v1601 = vadd.f32 %v1529, %v1593
      %v1602 = vadd.f32 %v1530, %v1594
      %1603 = vrot.lane.b32.xlu0 %v1195, 113
      %v1604 = vpop.permute.xlu0 %1603
      %1605 = vrot.lane.b32.xlu0 %v1197, 113
      %v1606 = vpop.permute.xlu0 %1605
      %1607 = vrot.lane.b32.xlu0 %v1199, 113
      %v1608 = vpop.permute.xlu0 %1607
      %1609 = vrot.lane.b32.xlu0 %v1201, 113
      %v1610 = vpop.permute.xlu0 %1609
      %1611 = vrot.lane.b32.xlu0 %v1196, 113
      %v1612 = vpop.permute.xlu0 %1611
      %1613 = vrot.lane.b32.xlu0 %v1198, 113
      %v1614 = vpop.permute.xlu0 %1613
      %1615 = vrot.lane.b32.xlu0 %v1200, 113
      %v1616 = vpop.permute.xlu0 %1615
      %1617 = vrot.lane.b32.xlu0 %v1202, 113
      %v1618 = vpop.permute.xlu0 %1617
      %v1619 = vsel %vm430, %v1604, %v1612
      %v1620 = vsel %vm430, %v1606, %v1614
      %v1621 = vsel %vm430, %v1608, %v1616
      %v1622 = vsel %vm430, %v1610, %v1618
      %v1623 = vsel %vm430, %v1612, %v1604
      %v1624 = vsel %vm430, %v1614, %v1606
      %v1625 = vsel %vm430, %v1616, %v1608
      %v1626 = vsel %vm430, %v1618, %v1610
      %v1627 = vmul.f32 %v1619, %v345
      %v1628 = vmul.f32 %v1623, %v346
      %v1629 = vmul.f32 %v1620, %v345
      %v1630 = vmul.f32 %v1624, %v346
      %v1631 = vmul.f32 %v1621, %v345
      %v1632 = vmul.f32 %v1625, %v346
      %v1633 = vmul.f32 %v1622, %v345
      %v1634 = vmul.f32 %v1626, %v346
      %v1635 = vld [vmem:[%s3 + $0xc0] sm:$0xff]
      %v1636 = vld [vmem:[%s3 + $0xc8] sm:$0xff]
      %v1637 = vld [vmem:[%s3 + $0xd0] sm:$0xff]
      %v1638 = vld [vmem:[%s3 + $0xd8] sm:$0xff]
      %1640 = vset.pattern.permute.xlu0 0
      %1641 = vperm.xlu0 %1640, %v1635
      %v1642 = vpop.permute.xlu0 %1641
      %1645 = vset.pattern.permute.xlu0 0
      %1646 = vperm.xlu0 %1645, %v1636
      %v1647 = vpop.permute.xlu0 %1646
      %1650 = vset.pattern.permute.xlu0 0
      %1651 = vperm.xlu0 %1650, %v1637
      %v1652 = vpop.permute.xlu0 %1651
      %1655 = vset.pattern.permute.xlu0 0
      %1656 = vperm.xlu0 %1655, %v1638
      %v1657 = vpop.permute.xlu0 %1656
      %v1659 = vmul.f32 %v1627, %v1642
      %v1660 = vmul.f32 %v1628, %v1642
      %v1661 = vmul.f32 %v1629, %v1647
      %v1662 = vmul.f32 %v1630, %v1647
      %v1663 = vmul.f32 %v1631, %v1652
      %v1664 = vmul.f32 %v1632, %v1652
      %v1665 = vmul.f32 %v1633, %v1657
      %v1666 = vmul.f32 %v1634, %v1657
      %v1667 = vadd.f32 %v1595, %v1659
      %v1668 = vadd.f32 %v1596, %v1660
      %v1669 = vadd.f32 %v1597, %v1661
      %v1670 = vadd.f32 %v1598, %v1662
      %v1671 = vadd.f32 %v1599, %v1663
      %v1672 = vadd.f32 %v1600, %v1664
      %v1673 = vadd.f32 %v1601, %v1665
      %v1674 = vadd.f32 %v1602, %v1666
      %1675 = vrot.lane.b32.xlu0 %v1195, 112
      %v1676 = vpop.permute.xlu0 %1675
      %1677 = vrot.lane.b32.xlu0 %v1197, 112
      %v1678 = vpop.permute.xlu0 %1677
      %1679 = vrot.lane.b32.xlu0 %v1199, 112
      %v1680 = vpop.permute.xlu0 %1679
      %1681 = vrot.lane.b32.xlu0 %v1201, 112
      %v1682 = vpop.permute.xlu0 %1681
      %1683 = vrot.lane.b32.xlu0 %v1196, 112
      %v1684 = vpop.permute.xlu0 %1683
      %1685 = vrot.lane.b32.xlu0 %v1198, 112
      %v1686 = vpop.permute.xlu0 %1685
      %1687 = vrot.lane.b32.xlu0 %v1200, 112
      %v1688 = vpop.permute.xlu0 %1687
      %1689 = vrot.lane.b32.xlu0 %v1202, 112
      %v1690 = vpop.permute.xlu0 %1689
      %v1691 = vsel %vm441, %v1676, %v1684
      %v1692 = vsel %vm441, %v1678, %v1686
      %v1693 = vsel %vm441, %v1680, %v1688
      %v1694 = vsel %vm441, %v1682, %v1690
      %v1695 = vsel %vm441, %v1684, %v1676
      %v1696 = vsel %vm441, %v1686, %v1678
      %v1697 = vsel %vm441, %v1688, %v1680
      %v1698 = vsel %vm441, %v1690, %v1682
      %v1699 = vmul.f32 %v1691, %v353
      %v1700 = vmul.f32 %v1695, %v354
      %v1701 = vmul.f32 %v1692, %v353
      %v1702 = vmul.f32 %v1696, %v354
      %v1703 = vmul.f32 %v1693, %v353
      %v1704 = vmul.f32 %v1697, %v354
      %v1705 = vmul.f32 %v1694, %v353
      %v1706 = vmul.f32 %v1698, %v354
      %v1707 = vld [vmem:[%s3 + $0xe0] sm:$0xff]
      %v1708 = vld [vmem:[%s3 + $0xe8] sm:$0xff]
      %v1709 = vld [vmem:[%s3 + $0xf0] sm:$0xff]
      %v1710 = vld [vmem:[%s3 + $0xf8] sm:$0xff]
      %1712 = vset.pattern.permute.xlu0 0
      %1713 = vperm.xlu0 %1712, %v1707
      %v1714 = vpop.permute.xlu0 %1713
      %1717 = vset.pattern.permute.xlu0 0
      %1718 = vperm.xlu0 %1717, %v1708
      %v1719 = vpop.permute.xlu0 %1718
      %1722 = vset.pattern.permute.xlu0 0
      %1723 = vperm.xlu0 %1722, %v1709
      %v1724 = vpop.permute.xlu0 %1723
      %1727 = vset.pattern.permute.xlu0 0
      %1728 = vperm.xlu0 %1727, %v1710
      %v1729 = vpop.permute.xlu0 %1728
      %v1731 = vmul.f32 %v1699, %v1714
      %v1732 = vmul.f32 %v1700, %v1714
      %v1733 = vmul.f32 %v1701, %v1719
      %v1734 = vmul.f32 %v1702, %v1719
      %v1735 = vmul.f32 %v1703, %v1724
      %v1736 = vmul.f32 %v1704, %v1724
      %v1737 = vmul.f32 %v1705, %v1729
      %v1738 = vmul.f32 %v1706, %v1729
      %v1739 = vadd.f32 %v1667, %v1731
      %v1740 = vadd.f32 %v1668, %v1732
      %v1741 = vadd.f32 %v1669, %v1733
      %v1742 = vadd.f32 %v1670, %v1734
      %v1743 = vadd.f32 %v1671, %v1735
      %v1744 = vadd.f32 %v1672, %v1736
      %v1745 = vadd.f32 %v1673, %v1737
      %v1746 = vadd.f32 %v1674, %v1738
      %1747 = vrot.lane.b32.xlu0 %v1195, 111
      %v1748 = vpop.permute.xlu0 %1747
      %1749 = vrot.lane.b32.xlu0 %v1197, 111
      %v1750 = vpop.permute.xlu0 %1749
      %1751 = vrot.lane.b32.xlu0 %v1199, 111
      %v1752 = vpop.permute.xlu0 %1751
      %1753 = vrot.lane.b32.xlu0 %v1201, 111
      %v1754 = vpop.permute.xlu0 %1753
      %1755 = vrot.lane.b32.xlu0 %v1196, 111
      %v1756 = vpop.permute.xlu0 %1755
      %1757 = vrot.lane.b32.xlu0 %v1198, 111
      %v1758 = vpop.permute.xlu0 %1757
      %1759 = vrot.lane.b32.xlu0 %v1200, 111
      %v1760 = vpop.permute.xlu0 %1759
      %1761 = vrot.lane.b32.xlu0 %v1202, 111
      %v1762 = vpop.permute.xlu0 %1761
      %v1763 = vsel %vm452, %v1748, %v1756
      %v1764 = vsel %vm452, %v1750, %v1758
      %v1765 = vsel %vm452, %v1752, %v1760
      %v1766 = vsel %vm452, %v1754, %v1762
      %v1767 = vsel %vm452, %v1756, %v1748
      %v1768 = vsel %vm452, %v1758, %v1750
      %v1769 = vsel %vm452, %v1760, %v1752
      %v1770 = vsel %vm452, %v1762, %v1754
      %v1771 = vmul.f32 %v1763, %v361
      %v1772 = vmul.f32 %v1767, %v362
      %v1773 = vmul.f32 %v1764, %v361
      %v1774 = vmul.f32 %v1768, %v362
      %v1775 = vmul.f32 %v1765, %v361
      %v1776 = vmul.f32 %v1769, %v362
      %v1777 = vmul.f32 %v1766, %v361
      %v1778 = vmul.f32 %v1770, %v362
      %v1779 = vld [vmem:[%s3 + $0x100] sm:$0xff]
      %v1780 = vld [vmem:[%s3 + $0x108] sm:$0xff]
      %v1781 = vld [vmem:[%s3 + $0x110] sm:$0xff]
      %v1782 = vld [vmem:[%s3 + $0x118] sm:$0xff]
      %1784 = vset.pattern.permute.xlu0 0
      %1785 = vperm.xlu0 %1784, %v1779
      %v1786 = vpop.permute.xlu0 %1785
      %1789 = vset.pattern.permute.xlu0 0
      %1790 = vperm.xlu0 %1789, %v1780
      %v1791 = vpop.permute.xlu0 %1790
      %1794 = vset.pattern.permute.xlu0 0
      %1795 = vperm.xlu0 %1794, %v1781
      %v1796 = vpop.permute.xlu0 %1795
      %1799 = vset.pattern.permute.xlu0 0
      %1800 = vperm.xlu0 %1799, %v1782
      %v1801 = vpop.permute.xlu0 %1800
      %v1803 = vmul.f32 %v1771, %v1786
      %v1804 = vmul.f32 %v1772, %v1786
      %v1805 = vmul.f32 %v1773, %v1791
      %v1806 = vmul.f32 %v1774, %v1791
      %v1807 = vmul.f32 %v1775, %v1796
      %v1808 = vmul.f32 %v1776, %v1796
      %v1809 = vmul.f32 %v1777, %v1801
      %v1810 = vmul.f32 %v1778, %v1801
      %v1811 = vadd.f32 %v1739, %v1803
      %v1812 = vadd.f32 %v1740, %v1804
      %v1813 = vadd.f32 %v1741, %v1805
      %v1814 = vadd.f32 %v1742, %v1806
      %v1815 = vadd.f32 %v1743, %v1807
      %v1816 = vadd.f32 %v1744, %v1808
      %v1817 = vadd.f32 %v1745, %v1809
      %v1818 = vadd.f32 %v1746, %v1810
      %v1819 = vadd.f32 %v1811, %v1813
      %v1820 = vadd.f32 %v1819, %v1815
      %v1821 = vadd.f32 %v1820, %v1817
      %v1822 = vrot.slane %v1821, 4
      %v1823 = vadd.f32 %v1821, %v1822
      %v1824 = vrot.slane %v1823, 2
      %v1825 = vadd.f32 %v1823, %v1824
      %v1826 = vrot.slane %v1825, 1
      %v1827 = vadd.f32 %v1825, %v1826
      %v1828 = vadd.f32 %v1812, %v1814
      %v1829 = vadd.f32 %v1828, %v1816
      %v1830 = vadd.f32 %v1829, %v1818
      %v1831 = vrot.slane %v1830, 4
      %v1832 = vadd.f32 %v1830, %v1831
      %v1833 = vrot.slane %v1832, 2
      %v1834 = vadd.f32 %v1832, %v1833
      %v1835 = vrot.slane %v1834, 1
      %v1836 = vadd.f32 %v1834, %v1835
      %v1837 = vld [vmem:[#allocation3] sm:$0x1]
      %1839 = vset.pattern.permute.xlu0 0
      %1840 = vperm.xlu0 %1839, %v1837
      %v1841 = vpop.permute.xlu0 %1840
      %v1843 = vperm.slane %v1841, 0
      %v1844 = vadd.f32 %v1827, %v1843
      %v1845 = vadd.f32 %v1836, %v1843
      %v1848 = vrot.slane %v1845, 7
      %vm1849 = vcmask 1040384
      %v1850 = vsel %vm1849, %v1844, %v1848
      %v1852 = vlaneseq
      %vm1853 = vcmp.ge.s32.totalorder %v1852, 0
      %vm1854 = vcmp.lt.s32.totalorder %v1852, 256
      %vm1855 = vmand %vm1853, %vm1854
      %1856 = vst.msk [vmem:[%s251] sm:$0x3] %vm1855, %v1850
      %p1857 = scmp.lt.s32.totalorder %s19, 1
      %s1858 = scalar_select %p1857, %s19, 1
      %s1859 = smul.addr %s1858, 2
      %s1860 = scalar_lea.vmem %s6, %s1859
      // Predicated region
      $region45: #{logit_classification_head.1} parent=43 // pred_check
        %p1861 = pneg %p168
      $region46: #{logit_classification_head.1} parent=43 // pred_check_branch
        %1863 = sbr.rel (%p1861) target = $region48
      $region47: #{logit_classification_head.1} parent=43 // pred_region
        _
      $region48: #{logit_classification_head.1} parent=43 // pred_fallthru
        _
    $region44: #{logit_classification_head.1} parent=5 // pred_fallthru
      _
    %p1864 = scmp.le.s32.totalorder 2, %s14
    // Predicated region
    $region49: #{logit_classification_head.1} parent=5 // pred_check
      %p1865 = pneg %p1864
    $region50: #{logit_classification_head.1} parent=5 // pred_check_branch
      %1867 = sbr.rel (%p1865) target = $region52
    $region51: #{logit_classification_head.1} parent=5 // pred_region
      %s1868 = ssub.s32 %s14, 2
      // Predicated region
      $region53: #{logit_classification_head.1} parent=51 // pred_check
        %p1869 = pneg %p174
      $region54: #{logit_classification_head.1} parent=51 // pred_check_branch
        %1871 = sbr.rel (%p1869) target = $region56
      $region55: #{logit_classification_head.1} parent=51 // pred_region
        %p1872 = scmp.lt.s32.totalorder %s20, 1
        %s1873 = scalar_select %p1872, %s20, 1
        %s1874 = smul.addr %s1873, 2
        %s1875 = scalar_lea.vmem %s6, %s1874
      $region56: #{logit_classification_head.1} parent=51 // pred_fallthru
        _
    $region52: #{logit_classification_head.1} parent=5 // pred_fallthru
      _
  $region6: #{logit_classification_head.1} parent=0 // loop_footer
    %s18 = sadd.s32 1, %s14
  $region7: #{logit_classification_head.1} parent=0 // loop_footer_branch
    %13 = sbr.rel target = $region3
  $region8: #{logit_classification_head.1} parent=0 // loop_exit
    _

</llo_original>
